<compile_context>
chip_gen: v7x
topology: tpu7x:2x2x1
jax: 0.10.0
libtpu: 0.0.40
codegen_flags: <defaults>
</compile_context>

<pallas_src>
import functools

import jax
import jax.numpy as jnp
from jax.experimental import pallas as pl
from jax.experimental.pallas import tpu as pltpu


def gru_kernel(lens_ref, gi_ref, whh_ref, bhh_ref, out_ref, hn_ref, h_scratch,
               *, tb_size, hidden):
    tb = pl.program_id(0)

    @pl.when(tb == 0)
    def _():
        h_scratch[...] = jnp.zeros_like(h_scratch)

    lens = lens_ref[...]                      # (B, 1) int32
    whh = whh_ref[...]                        # (H, 3H) f32, gate order [r, z, n]
    bhh = bhh_ref[...]                        # (1, 3H) f32
    H = hidden
    base_t = tb * tb_size

    h = h_scratch[...]                        # (B, H) f32, carried across grid steps
    outs = []
    # Statically unrolled time loop: one recurrent MXU dot per step, input
    # projections were precomputed in the wrapper.
    for tl in range(tb_size):
        gi = gi_ref[tl]                       # (B, 3H) f32
        gh = jnp.dot(h, whh, preferred_element_type=jnp.float32) + bhh
        r = jax.nn.sigmoid(gi[:, 0:H] + gh[:, 0:H])
        z = jax.nn.sigmoid(gi[:, H:2 * H] + gh[:, H:2 * H])
        n = jnp.tanh(gi[:, 2 * H:3 * H] + r * gh[:, 2 * H:3 * H])
        h_new = (1.0 - z) * n + z * h
        valid = (base_t + tl) < lens          # (B, 1) bool — freeze past length
        h = jnp.where(valid, h_new, h)
        outs.append(jnp.where(valid, h_new, 0.0))

    h_scratch[...] = h
    # Single lane-dense (B, TB*H) store per grid step.
    out_ref[...] = jnp.concatenate(outs, axis=-1).astype(out_ref.dtype)

    @pl.when(tb == pl.num_programs(0) - 1)
    def _():
        hn_ref[...] = h.astype(hn_ref.dtype)


def gru_forward(sequences, lengths, wih, whh, bih, bhh, *, time_block=None):
    """sequences: (B, T, I) float32 (batch_first), lengths: (B,) int32.

    wih: (I, 3H), whh: (H, 3H), bih/bhh: (3H,), gate order [r, z, n]
    (i.e. the PyTorch weight_ih_l0/weight_hh_l0 matrices transposed).
    Returns (outputs (B, T, H), h_n (1, B, H)).
    """
    B, T, I = sequences.shape
    H = whh.shape[0]
    G = 3 * H

    # Hoist the input projections out of the recurrence: one well-shaped
    # matmul over all timesteps, produced time-major so the kernel indexes the
    # leading dim. (bf16 MXU operands would be a further win for large H on
    # v6e/v7x; kept f32 here to match the f32 reference exactly.)
    gi = jnp.einsum('bti,ig->tbg', sequences.astype(jnp.float32),
                    wih.astype(jnp.float32),
                    precision=jax.lax.Precision.HIGHEST)
    gi = gi + bih.reshape(1, 1, G).astype(jnp.float32)      # (T, B, 3H)

    # Time-block size: whole (8-padded) sequence per grid step when small,
    # otherwise 64-step blocks (multiple of 8 so blocked out_spec stays legal).
    T8 = pl.cdiv(T, 8) * 8
    TB = time_block or (T8 if T8 <= 64 else 64)
    T_pad = pl.cdiv(T, TB) * TB
    if T_pad != T:
        # Padded steps are >= lengths so h freezes and outputs are zero.
        gi = jnp.pad(gi, ((0, T_pad - T), (0, 0), (0, 0)))

    lens2d = lengths.astype(jnp.int32).reshape(B, 1)

    out_flat, h_n = pl.pallas_call(
        functools.partial(gru_kernel, tb_size=TB, hidden=H),
        out_shape=(
            jax.ShapeDtypeStruct((B, T_pad * H), sequences.dtype),
            jax.ShapeDtypeStruct((B, H), sequences.dtype),
        ),
        grid_spec=pltpu.PrefetchScalarGridSpec(
            num_scalar_prefetch=0,
            grid=(T_pad // TB,),
            in_specs=[
                pl.BlockSpec((B, 1), lambda tb: (0, 0)),          # lengths (resident)
                pl.BlockSpec((TB, B, G), lambda tb: (tb, 0, 0)),  # precomputed gi block
                pl.BlockSpec((H, G), lambda tb: (0, 0)),          # fused W_hh (resident)
                pl.BlockSpec((1, G), lambda tb: (0, 0)),          # b_hh (resident)
            ],
            out_specs=[
                pl.BlockSpec((B, TB * H), lambda tb: (0, tb)),    # lane-dense output slab
                pl.BlockSpec((B, H), lambda tb: (0, 0)),          # final hidden (resident)
            ],
            scratch_shapes=[pltpu.VMEM((B, H), jnp.float32)],
        ),
        compiler_params=pltpu.CompilerParams(
            dimension_semantics=("arbitrary",)),                  # sequential in time
    )(lens2d, gi, whh.astype(jnp.float32), bhh.reshape(1, G).astype(jnp.float32))

    outputs = out_flat.reshape(B, T_pad, H)[:, :T, :]             # free reshape, row-major
    return outputs, h_n[None]                                     # h_n: (1, B, H)


def gru_reference(sequences, lengths, wih, whh, bih, bhh):
    """Pure-JAX reference with PyTorch GRU + pack/pad semantics (fused weights)."""
    B, T, I = sequences.shape
    H = whh.shape[0]
    h = jnp.zeros((B, H), jnp.float32)
    outs = []
    hp = jax.lax.Precision.HIGHEST
    for t in range(T):
        x = sequences[:, t, :].astype(jnp.float32)
        gi = jnp.dot(x, wih, precision=hp) + bih
        gh = jnp.dot(h, whh, precision=hp) + bhh
        r = jax.nn.sigmoid(gi[:, :H] + gh[:, :H])
        z = jax.nn.sigmoid(gi[:, H:2 * H] + gh[:, H:2 * H])
        n = jnp.tanh(gi[:, 2 * H:] + r * gh[:, 2 * H:])
        h_new = (1.0 - z) * n + z * h
        valid = (t < lengths)[:, None]
        h = jnp.where(valid, h_new, h)
        outs.append(jnp.where(valid, h_new, 0.0))
    return jnp.stack(outs, axis=1), h[None]


if __name__ == "__main__":
    # cfg.SPATIAL_GRAPH.GRU: INPUT_SIZE=32, HIDDEN_SIZE=32, NUM_LAYERS=1,
    # BIAS=True, DROPOUT=0.0, BIDIRECTIONAL=False, BATCH_FIRST=True
    # TODO(synk): num_layers>1 / bidirectional stacking not implemented (cfg uses 1 layer, unidirectional).
    B, T, I, H = 2, 8, 32, 32

    key = jax.random.PRNGKey(0)
    k_x, k_wih, k_whh, k_bih, k_bhh = jax.random.split(key, 5)
    bound = 1.0 / jnp.sqrt(jnp.float32(H))

    sequences = jax.random.normal(k_x, (B, T, I), jnp.float32)
    lengths = jnp.array([T, 5], jnp.int32)

    # Gate-fused, pre-transposed weights: (in_dim, 3H), gate order [r, z, n]
    wih = jax.random.uniform(k_wih, (I, 3 * H), jnp.float32, -bound, bound)
    whh = jax.random.uniform(k_whh, (H, 3 * H), jnp.float32, -bound, bound)
    bih = jax.random.uniform(k_bih, (3 * H,), jnp.float32, -bound, bound)
    bhh = jax.random.uniform(k_bhh, (3 * H,), jnp.float32, -bound, bound)

    outputs, h_n = jax.jit(gru_forward)(sequences, lengths, wih, whh, bih, bhh)
    jax.block_until_ready((outputs, h_n))

    ref_out, ref_hn = gru_reference(sequences, lengths, wih, whh, bih, bhh)
    assert outputs.shape == (B, T, H) and h_n.shape == (1, B, H)
    assert jnp.allclose(outputs, ref_out, atol=1e-4, rtol=1e-4)
    assert jnp.allclose(h_n, ref_hn, atol=1e-4, rtol=1e-4)

    print("KERNEL_OK")
</pallas_src>

<mosaic_0001>
module attributes {stable_mosaic.version = 11 : i64} {
  func.func @gru_kernel(%arg0: i32, %arg1: memref<2x1xi32, #tpu.memory_space<vmem>>, %arg2: memref<8x2x96xf32, #tpu.memory_space<vmem>>, %arg3: memref<32x96xf32, #tpu.memory_space<vmem>>, %arg4: memref<1x96xf32, #tpu.memory_space<vmem>>, %arg5: memref<2x256xf32, #tpu.memory_space<vmem>>, %arg6: memref<2x32xf32, #tpu.memory_space<vmem>>, %arg7: memref<2x32xf32, #tpu.memory_space<vmem>>) attributes {dimension_semantics = [#tpu.dimension_semantics<arbitrary>], iteration_bounds = array<i64: 1>, scalar_prefetch = 0 : i64, scratch_operands = 1 : i64, tpu.core_type = #tpu.core_type<tc>, window_params = [{pipeline_mode = #tpu.pipeline_mode<synchronous>, transform_indices = @transform_0, window_bounds = array<i64: 2, 1>}, {transform_indices = @transform_1, window_bounds = array<i64: 8, 2, 96>}, {pipeline_mode = #tpu.pipeline_mode<synchronous>, transform_indices = @transform_2, window_bounds = array<i64: 32, 96>}, {pipeline_mode = #tpu.pipeline_mode<synchronous>, transform_indices = @transform_3, window_bounds = array<i64: 1, 96>}, {transform_indices = @transform_4, window_bounds = array<i64: 2, 256>}, {pipeline_mode = #tpu.pipeline_mode<synchronous>, transform_indices = @transform_5, window_bounds = array<i64: 2, 32>}]} {
    %c0_i32 = arith.constant 0 : i32
    %0 = arith.cmpi eq, %arg0, %c0_i32 : i32
    %1 = arith.extui %0 : i1 to i32
    %c0_i32_0 = arith.constant 0 : i32
    %2 = arith.cmpi ne, %1, %c0_i32_0 : i32
    scf.if %2 {
      %cst_71 = arith.constant 0.000000e+00 : f32
      %342 = vector.broadcast %cst_71 : f32 to vector<2x32xf32>
      %c0_72 = arith.constant 0 : index
      %c0_73 = arith.constant 0 : index
      %343 = vector.load %arg7[%c0_72, %c0_73] : memref<2x32xf32, #tpu.memory_space<vmem>>, vector<2x32xf32>
      tpu.vector_store %arg7[%c0_72, %c0_73], %342 {strides = array<i32>} : memref<2x32xf32, #tpu.memory_space<vmem>>, vector<2x32xf32>,
    } else {
    }
    %c0 = arith.constant 0 : index
    %c0_1 = arith.constant 0 : index
    %3 = vector.load %arg1[%c0, %c0_1] : memref<2x1xi32, #tpu.memory_space<vmem>>, vector<2x1xi32>
    %c0_2 = arith.constant 0 : index
    %c0_3 = arith.constant 0 : index
    %4 = vector.load %arg3[%c0_2, %c0_3] : memref<32x96xf32, #tpu.memory_space<vmem>>, vector<32x96xf32>
    %c0_4 = arith.constant 0 : index
    %c0_5 = arith.constant 0 : index
    %5 = vector.load %arg4[%c0_4, %c0_5] : memref<1x96xf32, #tpu.memory_space<vmem>>, vector<1x96xf32>
    %c8_i32 = arith.constant 8 : i32
    %6 = arith.muli %arg0, %c8_i32 : i32
    %c0_6 = arith.constant 0 : index
    %c0_7 = arith.constant 0 : index
    %7 = vector.load %arg7[%c0_6, %c0_7] : memref<2x32xf32, #tpu.memory_space<vmem>>, vector<2x32xf32>
    %c0_8 = arith.constant 0 : index
    %c0_9 = arith.constant 0 : index
    %c0_10 = arith.constant 0 : index
    %8 = vector.load %arg2[%c0_8, %c0_9, %c0_10] : memref<8x2x96xf32, #tpu.memory_space<vmem>>, vector<1x2x96xf32>
    %9 = vector.shape_cast %8 : vector<1x2x96xf32> to vector<2x96xf32>
    %cst = arith.constant dense<0.000000e+00> : vector<2x96xf32>
    %10 = tpu.matmul %7, %4, %cst {dimension_numbers = #tpu.dot_dimension_numbers<[1], [0], [0], [1], [0, 0, 1, 1], [], []>} : vector<2x32xf32>, vector<32x96xf32>, vector<2x96xf32> -> vector<2x96xf32>
    %11 = vector.broadcast %5 : vector<1x96xf32> to vector<2x96xf32>
    %12 = arith.addf %10, %11 : vector<2x96xf32>
    %13 = vector.extract_strided_slice %9 {offsets = [0, 0], sizes = [2, 32], strides = [1, 1]} : vector<2x96xf32> to vector<2x32xf32>
    %14 = vector.extract_strided_slice %12 {offsets = [0, 0], sizes = [2, 32], strides = [1, 1]} : vector<2x96xf32> to vector<2x32xf32>
    %15 = arith.addf %13, %14 : vector<2x32xf32>
    %16 = arith.negf %15 : vector<2x32xf32>
    %17 = math.exp %16 : vector<2x32xf32>
    %cst_11 = arith.constant 1.000000e+00 : f32
    %18 = vector.broadcast %cst_11 : f32 to vector<2x32xf32>
    %19 = arith.addf %18, %17 : vector<2x32xf32>
    %20 = arith.divf %18, %19 : vector<2x32xf32>
    %21 = vector.extract_strided_slice %9 {offsets = [0, 32], sizes = [2, 32], strides = [1, 1]} : vector<2x96xf32> to vector<2x32xf32>
    %22 = vector.extract_strided_slice %12 {offsets = [0, 32], sizes = [2, 32], strides = [1, 1]} : vector<2x96xf32> to vector<2x32xf32>
    %23 = arith.addf %21, %22 : vector<2x32xf32>
    %24 = arith.negf %23 : vector<2x32xf32>
    %25 = math.exp %24 : vector<2x32xf32>
    %cst_12 = arith.constant 1.000000e+00 : f32
    %26 = vector.broadcast %cst_12 : f32 to vector<2x32xf32>
    %27 = arith.addf %26, %25 : vector<2x32xf32>
    %28 = arith.divf %26, %27 : vector<2x32xf32>
    %29 = vector.extract_strided_slice %9 {offsets = [0, 64], sizes = [2, 32], strides = [1, 1]} : vector<2x96xf32> to vector<2x32xf32>
    %30 = vector.extract_strided_slice %12 {offsets = [0, 64], sizes = [2, 32], strides = [1, 1]} : vector<2x96xf32> to vector<2x32xf32>
    %31 = arith.mulf %20, %30 : vector<2x32xf32>
    %32 = arith.addf %29, %31 : vector<2x32xf32>
    %33 = math.tanh %32 : vector<2x32xf32>
    %cst_13 = arith.constant 1.000000e+00 : f32
    %34 = vector.broadcast %cst_13 : f32 to vector<2x32xf32>
    %35 = arith.subf %34, %28 : vector<2x32xf32>
    %36 = arith.mulf %35, %33 : vector<2x32xf32>
    %37 = arith.mulf %28, %7 : vector<2x32xf32>
    %38 = arith.addf %36, %37 : vector<2x32xf32>
    %c0_i32_14 = arith.constant 0 : i32
    %39 = arith.addi %6, %c0_i32_14 : i32
    %40 = vector.broadcast %39 : i32 to vector<2x1xi32>
    %41 = arith.cmpi slt, %40, %3 : vector<2x1xi32>
    %42 = vector.shape_cast %41 : vector<2x1xi1> to vector<2x1xi1>
    %43 = vector.broadcast %42 : vector<2x1xi1> to vector<2x32xi1>
    %44 = arith.select %43, %38, %7 : vector<2x32xi1>, vector<2x32xf32>
    %cst_15 = arith.constant 0.000000e+00 : f32
    %45 = vector.shape_cast %41 : vector<2x1xi1> to vector<2x1xi1>
    %46 = vector.broadcast %45 : vector<2x1xi1> to vector<2x32xi1>
    %47 = vector.broadcast %cst_15 : f32 to vector<2x32xf32>
    %48 = arith.select %46, %38, %47 : vector<2x32xi1>, vector<2x32xf32>
    %c1 = arith.constant 1 : index
    %c0_16 = arith.constant 0 : index
    %c0_17 = arith.constant 0 : index
    %49 = vector.load %arg2[%c1, %c0_16, %c0_17] : memref<8x2x96xf32, #tpu.memory_space<vmem>>, vector<1x2x96xf32>
    %50 = vector.shape_cast %49 : vector<1x2x96xf32> to vector<2x96xf32>
    %cst_18 = arith.constant dense<0.000000e+00> : vector<2x96xf32>
    %51 = tpu.matmul %44, %4, %cst_18 {dimension_numbers = #tpu.dot_dimension_numbers<[1], [0], [0], [1], [0, 0, 1, 1], [], []>} : vector<2x32xf32>, vector<32x96xf32>, vector<2x96xf32> -> vector<2x96xf32>
    %52 = vector.broadcast %5 : vector<1x96xf32> to vector<2x96xf32>
    %53 = arith.addf %51, %52 : vector<2x96xf32>
    %54 = vector.extract_strided_slice %50 {offsets = [0, 0], sizes = [2, 32], strides = [1, 1]} : vector<2x96xf32> to vector<2x32xf32>
    %55 = vector.extract_strided_slice %53 {offsets = [0, 0], sizes = [2, 32], strides = [1, 1]} : vector<2x96xf32> to vector<2x32xf32>
    %56 = arith.addf %54, %55 : vector<2x32xf32>
    %57 = arith.negf %56 : vector<2x32xf32>
    %58 = math.exp %57 : vector<2x32xf32>
    %cst_19 = arith.constant 1.000000e+00 : f32
    %59 = vector.broadcast %cst_19 : f32 to vector<2x32xf32>
    %60 = arith.addf %59, %58 : vector<2x32xf32>
    %61 = arith.divf %59, %60 : vector<2x32xf32>
    %62 = vector.extract_strided_slice %50 {offsets = [0, 32], sizes = [2, 32], strides = [1, 1]} : vector<2x96xf32> to vector<2x32xf32>
    %63 = vector.extract_strided_slice %53 {offsets = [0, 32], sizes = [2, 32], strides = [1, 1]} : vector<2x96xf32> to vector<2x32xf32>
    %64 = arith.addf %62, %63 : vector<2x32xf32>
    %65 = arith.negf %64 : vector<2x32xf32>
    %66 = math.exp %65 : vector<2x32xf32>
    %cst_20 = arith.constant 1.000000e+00 : f32
    %67 = vector.broadcast %cst_20 : f32 to vector<2x32xf32>
    %68 = arith.addf %67, %66 : vector<2x32xf32>
    %69 = arith.divf %67, %68 : vector<2x32xf32>
    %70 = vector.extract_strided_slice %50 {offsets = [0, 64], sizes = [2, 32], strides = [1, 1]} : vector<2x96xf32> to vector<2x32xf32>
    %71 = vector.extract_strided_slice %53 {offsets = [0, 64], sizes = [2, 32], strides = [1, 1]} : vector<2x96xf32> to vector<2x32xf32>
    %72 = arith.mulf %61, %71 : vector<2x32xf32>
    %73 = arith.addf %70, %72 : vector<2x32xf32>
    %74 = math.tanh %73 : vector<2x32xf32>
    %cst_21 = arith.constant 1.000000e+00 : f32
    %75 = vector.broadcast %cst_21 : f32 to vector<2x32xf32>
    %76 = arith.subf %75, %69 : vector<2x32xf32>
    %77 = arith.mulf %76, %74 : vector<2x32xf32>
    %78 = arith.mulf %69, %44 : vector<2x32xf32>
    %79 = arith.addf %77, %78 : vector<2x32xf32>
    %c1_i32 = arith.constant 1 : i32
    %80 = arith.addi %6, %c1_i32 : i32
    %81 = vector.broadcast %80 : i32 to vector<2x1xi32>
    %82 = arith.cmpi slt, %81, %3 : vector<2x1xi32>
    %83 = vector.shape_cast %82 : vector<2x1xi1> to vector<2x1xi1>
    %84 = vector.broadcast %83 : vector<2x1xi1> to vector<2x32xi1>
    %85 = arith.select %84, %79, %44 : vector<2x32xi1>, vector<2x32xf32>
    %cst_22 = arith.constant 0.000000e+00 : f32
    %86 = vector.shape_cast %82 : vector<2x1xi1> to vector<2x1xi1>
    %87 = vector.broadcast %86 : vector<2x1xi1> to vector<2x32xi1>
    %88 = vector.broadcast %cst_22 : f32 to vector<2x32xf32>
    %89 = arith.select %87, %79, %88 : vector<2x32xi1>, vector<2x32xf32>
    %c2 = arith.constant 2 : index
    %c0_23 = arith.constant 0 : index
    %c0_24 = arith.constant 0 : index
    %90 = vector.load %arg2[%c2, %c0_23, %c0_24] : memref<8x2x96xf32, #tpu.memory_space<vmem>>, vector<1x2x96xf32>
    %91 = vector.shape_cast %90 : vector<1x2x96xf32> to vector<2x96xf32>
    %cst_25 = arith.constant dense<0.000000e+00> : vector<2x96xf32>
    %92 = tpu.matmul %85, %4, %cst_25 {dimension_numbers = #tpu.dot_dimension_numbers<[1], [0], [0], [1], [0, 0, 1, 1], [], []>} : vector<2x32xf32>, vector<32x96xf32>, vector<2x96xf32> -> vector<2x96xf32>
    %93 = vector.broadcast %5 : vector<1x96xf32> to vector<2x96xf32>
    %94 = arith.addf %92, %93 : vector<2x96xf32>
    %95 = vector.extract_strided_slice %91 {offsets = [0, 0], sizes = [2, 32], strides = [1, 1]} : vector<2x96xf32> to vector<2x32xf32>
    %96 = vector.extract_strided_slice %94 {offsets = [0, 0], sizes = [2, 32], strides = [1, 1]} : vector<2x96xf32> to vector<2x32xf32>
    %97 = arith.addf %95, %96 : vector<2x32xf32>
    %98 = arith.negf %97 : vector<2x32xf32>
    %99 = math.exp %98 : vector<2x32xf32>
    %cst_26 = arith.constant 1.000000e+00 : f32
    %100 = vector.broadcast %cst_26 : f32 to vector<2x32xf32>
    %101 = arith.addf %100, %99 : vector<2x32xf32>
    %102 = arith.divf %100, %101 : vector<2x32xf32>
    %103 = vector.extract_strided_slice %91 {offsets = [0, 32], sizes = [2, 32], strides = [1, 1]} : vector<2x96xf32> to vector<2x32xf32>
    %104 = vector.extract_strided_slice %94 {offsets = [0, 32], sizes = [2, 32], strides = [1, 1]} : vector<2x96xf32> to vector<2x32xf32>
    %105 = arith.addf %103, %104 : vector<2x32xf32>
    %106 = arith.negf %105 : vector<2x32xf32>
    %107 = math.exp %106 : vector<2x32xf32>
    %cst_27 = arith.constant 1.000000e+00 : f32
    %108 = vector.broadcast %cst_27 : f32 to vector<2x32xf32>
    %109 = arith.addf %108, %107 : vector<2x32xf32>
    %110 = arith.divf %108, %109 : vector<2x32xf32>
    %111 = vector.extract_strided_slice %91 {offsets = [0, 64], sizes = [2, 32], strides = [1, 1]} : vector<2x96xf32> to vector<2x32xf32>
    %112 = vector.extract_strided_slice %94 {offsets = [0, 64], sizes = [2, 32], strides = [1, 1]} : vector<2x96xf32> to vector<2x32xf32>
    %113 = arith.mulf %102, %112 : vector<2x32xf32>
    %114 = arith.addf %111, %113 : vector<2x32xf32>
    %115 = math.tanh %114 : vector<2x32xf32>
    %cst_28 = arith.constant 1.000000e+00 : f32
    %116 = vector.broadcast %cst_28 : f32 to vector<2x32xf32>
    %117 = arith.subf %116, %110 : vector<2x32xf32>
    %118 = arith.mulf %117, %115 : vector<2x32xf32>
    %119 = arith.mulf %110, %85 : vector<2x32xf32>
    %120 = arith.addf %118, %119 : vector<2x32xf32>
    %c2_i32 = arith.constant 2 : i32
    %121 = arith.addi %6, %c2_i32 : i32
    %122 = vector.broadcast %121 : i32 to vector<2x1xi32>
    %123 = arith.cmpi slt, %122, %3 : vector<2x1xi32>
    %124 = vector.shape_cast %123 : vector<2x1xi1> to vector<2x1xi1>
    %125 = vector.broadcast %124 : vector<2x1xi1> to vector<2x32xi1>
    %126 = arith.select %125, %120, %85 : vector<2x32xi1>, vector<2x32xf32>
    %cst_29 = arith.constant 0.000000e+00 : f32
    %127 = vector.shape_cast %123 : vector<2x1xi1> to vector<2x1xi1>
    %128 = vector.broadcast %127 : vector<2x1xi1> to vector<2x32xi1>
    %129 = vector.broadcast %cst_29 : f32 to vector<2x32xf32>
    %130 = arith.select %128, %120, %129 : vector<2x32xi1>, vector<2x32xf32>
    %c3 = arith.constant 3 : index
    %c0_30 = arith.constant 0 : index
    %c0_31 = arith.constant 0 : index
    %131 = vector.load %arg2[%c3, %c0_30, %c0_31] : memref<8x2x96xf32, #tpu.memory_space<vmem>>, vector<1x2x96xf32>
    %132 = vector.shape_cast %131 : vector<1x2x96xf32> to vector<2x96xf32>
    %cst_32 = arith.constant dense<0.000000e+00> : vector<2x96xf32>
    %133 = tpu.matmul %126, %4, %cst_32 {dimension_numbers = #tpu.dot_dimension_numbers<[1], [0], [0], [1], [0, 0, 1, 1], [], []>} : vector<2x32xf32>, vector<32x96xf32>, vector<2x96xf32> -> vector<2x96xf32>
    %134 = vector.broadcast %5 : vector<1x96xf32> to vector<2x96xf32>
    %135 = arith.addf %133, %134 : vector<2x96xf32>
    %136 = vector.extract_strided_slice %132 {offsets = [0, 0], sizes = [2, 32], strides = [1, 1]} : vector<2x96xf32> to vector<2x32xf32>
    %137 = vector.extract_strided_slice %135 {offsets = [0, 0], sizes = [2, 32], strides = [1, 1]} : vector<2x96xf32> to vector<2x32xf32>
    %138 = arith.addf %136, %137 : vector<2x32xf32>
    %139 = arith.negf %138 : vector<2x32xf32>
    %140 = math.exp %139 : vector<2x32xf32>
    %cst_33 = arith.constant 1.000000e+00 : f32
    %141 = vector.broadcast %cst_33 : f32 to vector<2x32xf32>
    %142 = arith.addf %141, %140 : vector<2x32xf32>
    %143 = arith.divf %141, %142 : vector<2x32xf32>
    %144 = vector.extract_strided_slice %132 {offsets = [0, 32], sizes = [2, 32], strides = [1, 1]} : vector<2x96xf32> to vector<2x32xf32>
    %145 = vector.extract_strided_slice %135 {offsets = [0, 32], sizes = [2, 32], strides = [1, 1]} : vector<2x96xf32> to vector<2x32xf32>
    %146 = arith.addf %144, %145 : vector<2x32xf32>
    %147 = arith.negf %146 : vector<2x32xf32>
    %148 = math.exp %147 : vector<2x32xf32>
    %cst_34 = arith.constant 1.000000e+00 : f32
    %149 = vector.broadcast %cst_34 : f32 to vector<2x32xf32>
    %150 = arith.addf %149, %148 : vector<2x32xf32>
    %151 = arith.divf %149, %150 : vector<2x32xf32>
    %152 = vector.extract_strided_slice %132 {offsets = [0, 64], sizes = [2, 32], strides = [1, 1]} : vector<2x96xf32> to vector<2x32xf32>
    %153 = vector.extract_strided_slice %135 {offsets = [0, 64], sizes = [2, 32], strides = [1, 1]} : vector<2x96xf32> to vector<2x32xf32>
    %154 = arith.mulf %143, %153 : vector<2x32xf32>
    %155 = arith.addf %152, %154 : vector<2x32xf32>
    %156 = math.tanh %155 : vector<2x32xf32>
    %cst_35 = arith.constant 1.000000e+00 : f32
    %157 = vector.broadcast %cst_35 : f32 to vector<2x32xf32>
    %158 = arith.subf %157, %151 : vector<2x32xf32>
    %159 = arith.mulf %158, %156 : vector<2x32xf32>
    %160 = arith.mulf %151, %126 : vector<2x32xf32>
    %161 = arith.addf %159, %160 : vector<2x32xf32>
    %c3_i32 = arith.constant 3 : i32
    %162 = arith.addi %6, %c3_i32 : i32
    %163 = vector.broadcast %162 : i32 to vector<2x1xi32>
    %164 = arith.cmpi slt, %163, %3 : vector<2x1xi32>
    %165 = vector.shape_cast %164 : vector<2x1xi1> to vector<2x1xi1>
    %166 = vector.broadcast %165 : vector<2x1xi1> to vector<2x32xi1>
    %167 = arith.select %166, %161, %126 : vector<2x32xi1>, vector<2x32xf32>
    %cst_36 = arith.constant 0.000000e+00 : f32
    %168 = vector.shape_cast %164 : vector<2x1xi1> to vector<2x1xi1>
    %169 = vector.broadcast %168 : vector<2x1xi1> to vector<2x32xi1>
    %170 = vector.broadcast %cst_36 : f32 to vector<2x32xf32>
    %171 = arith.select %169, %161, %170 : vector<2x32xi1>, vector<2x32xf32>
    %c4 = arith.constant 4 : index
    %c0_37 = arith.constant 0 : index
    %c0_38 = arith.constant 0 : index
    %172 = vector.load %arg2[%c4, %c0_37, %c0_38] : memref<8x2x96xf32, #tpu.memory_space<vmem>>, vector<1x2x96xf32>
    %173 = vector.shape_cast %172 : vector<1x2x96xf32> to vector<2x96xf32>
    %cst_39 = arith.constant dense<0.000000e+00> : vector<2x96xf32>
    %174 = tpu.matmul %167, %4, %cst_39 {dimension_numbers = #tpu.dot_dimension_numbers<[1], [0], [0], [1], [0, 0, 1, 1], [], []>} : vector<2x32xf32>, vector<32x96xf32>, vector<2x96xf32> -> vector<2x96xf32>
    %175 = vector.broadcast %5 : vector<1x96xf32> to vector<2x96xf32>
    %176 = arith.addf %174, %175 : vector<2x96xf32>
    %177 = vector.extract_strided_slice %173 {offsets = [0, 0], sizes = [2, 32], strides = [1, 1]} : vector<2x96xf32> to vector<2x32xf32>
    %178 = vector.extract_strided_slice %176 {offsets = [0, 0], sizes = [2, 32], strides = [1, 1]} : vector<2x96xf32> to vector<2x32xf32>
    %179 = arith.addf %177, %178 : vector<2x32xf32>
    %180 = arith.negf %179 : vector<2x32xf32>
    %181 = math.exp %180 : vector<2x32xf32>
    %cst_40 = arith.constant 1.000000e+00 : f32
    %182 = vector.broadcast %cst_40 : f32 to vector<2x32xf32>
    %183 = arith.addf %182, %181 : vector<2x32xf32>
    %184 = arith.divf %182, %183 : vector<2x32xf32>
    %185 = vector.extract_strided_slice %173 {offsets = [0, 32], sizes = [2, 32], strides = [1, 1]} : vector<2x96xf32> to vector<2x32xf32>
    %186 = vector.extract_strided_slice %176 {offsets = [0, 32], sizes = [2, 32], strides = [1, 1]} : vector<2x96xf32> to vector<2x32xf32>
    %187 = arith.addf %185, %186 : vector<2x32xf32>
    %188 = arith.negf %187 : vector<2x32xf32>
    %189 = math.exp %188 : vector<2x32xf32>
    %cst_41 = arith.constant 1.000000e+00 : f32
    %190 = vector.broadcast %cst_41 : f32 to vector<2x32xf32>
    %191 = arith.addf %190, %189 : vector<2x32xf32>
    %192 = arith.divf %190, %191 : vector<2x32xf32>
    %193 = vector.extract_strided_slice %173 {offsets = [0, 64], sizes = [2, 32], strides = [1, 1]} : vector<2x96xf32> to vector<2x32xf32>
    %194 = vector.extract_strided_slice %176 {offsets = [0, 64], sizes = [2, 32], strides = [1, 1]} : vector<2x96xf32> to vector<2x32xf32>
    %195 = arith.mulf %184, %194 : vector<2x32xf32>
    %196 = arith.addf %193, %195 : vector<2x32xf32>
    %197 = math.tanh %196 : vector<2x32xf32>
    %cst_42 = arith.constant 1.000000e+00 : f32
    %198 = vector.broadcast %cst_42 : f32 to vector<2x32xf32>
    %199 = arith.subf %198, %192 : vector<2x32xf32>
    %200 = arith.mulf %199, %197 : vector<2x32xf32>
    %201 = arith.mulf %192, %167 : vector<2x32xf32>
    %202 = arith.addf %200, %201 : vector<2x32xf32>
    %c4_i32 = arith.constant 4 : i32
    %203 = arith.addi %6, %c4_i32 : i32
    %204 = vector.broadcast %203 : i32 to vector<2x1xi32>
    %205 = arith.cmpi slt, %204, %3 : vector<2x1xi32>
    %206 = vector.shape_cast %205 : vector<2x1xi1> to vector<2x1xi1>
    %207 = vector.broadcast %206 : vector<2x1xi1> to vector<2x32xi1>
    %208 = arith.select %207, %202, %167 : vector<2x32xi1>, vector<2x32xf32>
    %cst_43 = arith.constant 0.000000e+00 : f32
    %209 = vector.shape_cast %205 : vector<2x1xi1> to vector<2x1xi1>
    %210 = vector.broadcast %209 : vector<2x1xi1> to vector<2x32xi1>
    %211 = vector.broadcast %cst_43 : f32 to vector<2x32xf32>
    %212 = arith.select %210, %202, %211 : vector<2x32xi1>, vector<2x32xf32>
    %c5 = arith.constant 5 : index
    %c0_44 = arith.constant 0 : index
    %c0_45 = arith.constant 0 : index
    %213 = vector.load %arg2[%c5, %c0_44, %c0_45] : memref<8x2x96xf32, #tpu.memory_space<vmem>>, vector<1x2x96xf32>
    %214 = vector.shape_cast %213 : vector<1x2x96xf32> to vector<2x96xf32>
    %cst_46 = arith.constant dense<0.000000e+00> : vector<2x96xf32>
    %215 = tpu.matmul %208, %4, %cst_46 {dimension_numbers = #tpu.dot_dimension_numbers<[1], [0], [0], [1], [0, 0, 1, 1], [], []>} : vector<2x32xf32>, vector<32x96xf32>, vector<2x96xf32> -> vector<2x96xf32>
    %216 = vector.broadcast %5 : vector<1x96xf32> to vector<2x96xf32>
    %217 = arith.addf %215, %216 : vector<2x96xf32>
    %218 = vector.extract_strided_slice %214 {offsets = [0, 0], sizes = [2, 32], strides = [1, 1]} : vector<2x96xf32> to vector<2x32xf32>
    %219 = vector.extract_strided_slice %217 {offsets = [0, 0], sizes = [2, 32], strides = [1, 1]} : vector<2x96xf32> to vector<2x32xf32>
    %220 = arith.addf %218, %219 : vector<2x32xf32>
    %221 = arith.negf %220 : vector<2x32xf32>
    %222 = math.exp %221 : vector<2x32xf32>
    %cst_47 = arith.constant 1.000000e+00 : f32
    %223 = vector.broadcast %cst_47 : f32 to vector<2x32xf32>
    %224 = arith.addf %223, %222 : vector<2x32xf32>
    %225 = arith.divf %223, %224 : vector<2x32xf32>
    %226 = vector.extract_strided_slice %214 {offsets = [0, 32], sizes = [2, 32], strides = [1, 1]} : vector<2x96xf32> to vector<2x32xf32>
    %227 = vector.extract_strided_slice %217 {offsets = [0, 32], sizes = [2, 32], strides = [1, 1]} : vector<2x96xf32> to vector<2x32xf32>
    %228 = arith.addf %226, %227 : vector<2x32xf32>
    %229 = arith.negf %228 : vector<2x32xf32>
    %230 = math.exp %229 : vector<2x32xf32>
    %cst_48 = arith.constant 1.000000e+00 : f32
    %231 = vector.broadcast %cst_48 : f32 to vector<2x32xf32>
    %232 = arith.addf %231, %230 : vector<2x32xf32>
    %233 = arith.divf %231, %232 : vector<2x32xf32>
    %234 = vector.extract_strided_slice %214 {offsets = [0, 64], sizes = [2, 32], strides = [1, 1]} : vector<2x96xf32> to vector<2x32xf32>
    %235 = vector.extract_strided_slice %217 {offsets = [0, 64], sizes = [2, 32], strides = [1, 1]} : vector<2x96xf32> to vector<2x32xf32>
    %236 = arith.mulf %225, %235 : vector<2x32xf32>
    %237 = arith.addf %234, %236 : vector<2x32xf32>
    %238 = math.tanh %237 : vector<2x32xf32>
    %cst_49 = arith.constant 1.000000e+00 : f32
    %239 = vector.broadcast %cst_49 : f32 to vector<2x32xf32>
    %240 = arith.subf %239, %233 : vector<2x32xf32>
    %241 = arith.mulf %240, %238 : vector<2x32xf32>
    %242 = arith.mulf %233, %208 : vector<2x32xf32>
    %243 = arith.addf %241, %242 : vector<2x32xf32>
    %c5_i32 = arith.constant 5 : i32
    %244 = arith.addi %6, %c5_i32 : i32
    %245 = vector.broadcast %244 : i32 to vector<2x1xi32>
    %246 = arith.cmpi slt, %245, %3 : vector<2x1xi32>
    %247 = vector.shape_cast %246 : vector<2x1xi1> to vector<2x1xi1>
    %248 = vector.broadcast %247 : vector<2x1xi1> to vector<2x32xi1>
    %249 = arith.select %248, %243, %208 : vector<2x32xi1>, vector<2x32xf32>
    %cst_50 = arith.constant 0.000000e+00 : f32
    %250 = vector.shape_cast %246 : vector<2x1xi1> to vector<2x1xi1>
    %251 = vector.broadcast %250 : vector<2x1xi1> to vector<2x32xi1>
    %252 = vector.broadcast %cst_50 : f32 to vector<2x32xf32>
    %253 = arith.select %251, %243, %252 : vector<2x32xi1>, vector<2x32xf32>
    %c6 = arith.constant 6 : index
    %c0_51 = arith.constant 0 : index
    %c0_52 = arith.constant 0 : index
    %254 = vector.load %arg2[%c6, %c0_51, %c0_52] : memref<8x2x96xf32, #tpu.memory_space<vmem>>, vector<1x2x96xf32>
    %255 = vector.shape_cast %254 : vector<1x2x96xf32> to vector<2x96xf32>
    %cst_53 = arith.constant dense<0.000000e+00> : vector<2x96xf32>
    %256 = tpu.matmul %249, %4, %cst_53 {dimension_numbers = #tpu.dot_dimension_numbers<[1], [0], [0], [1], [0, 0, 1, 1], [], []>} : vector<2x32xf32>, vector<32x96xf32>, vector<2x96xf32> -> vector<2x96xf32>
    %257 = vector.broadcast %5 : vector<1x96xf32> to vector<2x96xf32>
    %258 = arith.addf %256, %257 : vector<2x96xf32>
    %259 = vector.extract_strided_slice %255 {offsets = [0, 0], sizes = [2, 32], strides = [1, 1]} : vector<2x96xf32> to vector<2x32xf32>
    %260 = vector.extract_strided_slice %258 {offsets = [0, 0], sizes = [2, 32], strides = [1, 1]} : vector<2x96xf32> to vector<2x32xf32>
    %261 = arith.addf %259, %260 : vector<2x32xf32>
    %262 = arith.negf %261 : vector<2x32xf32>
    %263 = math.exp %262 : vector<2x32xf32>
    %cst_54 = arith.constant 1.000000e+00 : f32
    %264 = vector.broadcast %cst_54 : f32 to vector<2x32xf32>
    %265 = arith.addf %264, %263 : vector<2x32xf32>
    %266 = arith.divf %264, %265 : vector<2x32xf32>
    %267 = vector.extract_strided_slice %255 {offsets = [0, 32], sizes = [2, 32], strides = [1, 1]} : vector<2x96xf32> to vector<2x32xf32>
    %268 = vector.extract_strided_slice %258 {offsets = [0, 32], sizes = [2, 32], strides = [1, 1]} : vector<2x96xf32> to vector<2x32xf32>
    %269 = arith.addf %267, %268 : vector<2x32xf32>
    %270 = arith.negf %269 : vector<2x32xf32>
    %271 = math.exp %270 : vector<2x32xf32>
    %cst_55 = arith.constant 1.000000e+00 : f32
    %272 = vector.broadcast %cst_55 : f32 to vector<2x32xf32>
    %273 = arith.addf %272, %271 : vector<2x32xf32>
    %274 = arith.divf %272, %273 : vector<2x32xf32>
    %275 = vector.extract_strided_slice %255 {offsets = [0, 64], sizes = [2, 32], strides = [1, 1]} : vector<2x96xf32> to vector<2x32xf32>
    %276 = vector.extract_strided_slice %258 {offsets = [0, 64], sizes = [2, 32], strides = [1, 1]} : vector<2x96xf32> to vector<2x32xf32>
    %277 = arith.mulf %266, %276 : vector<2x32xf32>
    %278 = arith.addf %275, %277 : vector<2x32xf32>
    %279 = math.tanh %278 : vector<2x32xf32>
    %cst_56 = arith.constant 1.000000e+00 : f32
    %280 = vector.broadcast %cst_56 : f32 to vector<2x32xf32>
    %281 = arith.subf %280, %274 : vector<2x32xf32>
    %282 = arith.mulf %281, %279 : vector<2x32xf32>
    %283 = arith.mulf %274, %249 : vector<2x32xf32>
    %284 = arith.addf %282, %283 : vector<2x32xf32>
    %c6_i32 = arith.constant 6 : i32
    %285 = arith.addi %6, %c6_i32 : i32
    %286 = vector.broadcast %285 : i32 to vector<2x1xi32>
    %287 = arith.cmpi slt, %286, %3 : vector<2x1xi32>
    %288 = vector.shape_cast %287 : vector<2x1xi1> to vector<2x1xi1>
    %289 = vector.broadcast %288 : vector<2x1xi1> to vector<2x32xi1>
    %290 = arith.select %289, %284, %249 : vector<2x32xi1>, vector<2x32xf32>
    %cst_57 = arith.constant 0.000000e+00 : f32
    %291 = vector.shape_cast %287 : vector<2x1xi1> to vector<2x1xi1>
    %292 = vector.broadcast %291 : vector<2x1xi1> to vector<2x32xi1>
    %293 = vector.broadcast %cst_57 : f32 to vector<2x32xf32>
    %294 = arith.select %292, %284, %293 : vector<2x32xi1>, vector<2x32xf32>
    %c7 = arith.constant 7 : index
    %c0_58 = arith.constant 0 : index
    %c0_59 = arith.constant 0 : index
    %295 = vector.load %arg2[%c7, %c0_58, %c0_59] : memref<8x2x96xf32, #tpu.memory_space<vmem>>, vector<1x2x96xf32>
    %296 = vector.shape_cast %295 : vector<1x2x96xf32> to vector<2x96xf32>
    %cst_60 = arith.constant dense<0.000000e+00> : vector<2x96xf32>
    %297 = tpu.matmul %290, %4, %cst_60 {dimension_numbers = #tpu.dot_dimension_numbers<[1], [0], [0], [1], [0, 0, 1, 1], [], []>} : vector<2x32xf32>, vector<32x96xf32>, vector<2x96xf32> -> vector<2x96xf32>
    %298 = vector.broadcast %5 : vector<1x96xf32> to vector<2x96xf32>
    %299 = arith.addf %297, %298 : vector<2x96xf32>
    %300 = vector.extract_strided_slice %296 {offsets = [0, 0], sizes = [2, 32], strides = [1, 1]} : vector<2x96xf32> to vector<2x32xf32>
    %301 = vector.extract_strided_slice %299 {offsets = [0, 0], sizes = [2, 32], strides = [1, 1]} : vector<2x96xf32> to vector<2x32xf32>
    %302 = arith.addf %300, %301 : vector<2x32xf32>
    %303 = arith.negf %302 : vector<2x32xf32>
    %304 = math.exp %303 : vector<2x32xf32>
    %cst_61 = arith.constant 1.000000e+00 : f32
    %305 = vector.broadcast %cst_61 : f32 to vector<2x32xf32>
    %306 = arith.addf %305, %304 : vector<2x32xf32>
    %307 = arith.divf %305, %306 : vector<2x32xf32>
    %308 = vector.extract_strided_slice %296 {offsets = [0, 32], sizes = [2, 32], strides = [1, 1]} : vector<2x96xf32> to vector<2x32xf32>
    %309 = vector.extract_strided_slice %299 {offsets = [0, 32], sizes = [2, 32], strides = [1, 1]} : vector<2x96xf32> to vector<2x32xf32>
    %310 = arith.addf %308, %309 : vector<2x32xf32>
    %311 = arith.negf %310 : vector<2x32xf32>
    %312 = math.exp %311 : vector<2x32xf32>
    %cst_62 = arith.constant 1.000000e+00 : f32
    %313 = vector.broadcast %cst_62 : f32 to vector<2x32xf32>
    %314 = arith.addf %313, %312 : vector<2x32xf32>
    %315 = arith.divf %313, %314 : vector<2x32xf32>
    %316 = vector.extract_strided_slice %296 {offsets = [0, 64], sizes = [2, 32], strides = [1, 1]} : vector<2x96xf32> to vector<2x32xf32>
    %317 = vector.extract_strided_slice %299 {offsets = [0, 64], sizes = [2, 32], strides = [1, 1]} : vector<2x96xf32> to vector<2x32xf32>
    %318 = arith.mulf %307, %317 : vector<2x32xf32>
    %319 = arith.addf %316, %318 : vector<2x32xf32>
    %320 = math.tanh %319 : vector<2x32xf32>
    %cst_63 = arith.constant 1.000000e+00 : f32
    %321 = vector.broadcast %cst_63 : f32 to vector<2x32xf32>
    %322 = arith.subf %321, %315 : vector<2x32xf32>
    %323 = arith.mulf %322, %320 : vector<2x32xf32>
    %324 = arith.mulf %315, %290 : vector<2x32xf32>
    %325 = arith.addf %323, %324 : vector<2x32xf32>
    %c7_i32 = arith.constant 7 : i32
    %326 = arith.addi %6, %c7_i32 : i32
    %327 = vector.broadcast %326 : i32 to vector<2x1xi32>
    %328 = arith.cmpi slt, %327, %3 : vector<2x1xi32>
    %329 = vector.shape_cast %328 : vector<2x1xi1> to vector<2x1xi1>
    %330 = vector.broadcast %329 : vector<2x1xi1> to vector<2x32xi1>
    %331 = arith.select %330, %325, %290 : vector<2x32xi1>, vector<2x32xf32>
    %cst_64 = arith.constant 0.000000e+00 : f32
    %332 = vector.shape_cast %328 : vector<2x1xi1> to vector<2x1xi1>
    %333 = vector.broadcast %332 : vector<2x1xi1> to vector<2x32xi1>
    %334 = vector.broadcast %cst_64 : f32 to vector<2x32xf32>
    %335 = arith.select %333, %325, %334 : vector<2x32xi1>, vector<2x32xf32>
    %c0_65 = arith.constant 0 : index
    %c0_66 = arith.constant 0 : index
    %336 = vector.load %arg7[%c0_65, %c0_66] : memref<2x32xf32, #tpu.memory_space<vmem>>, vector<2x32xf32>
    tpu.vector_store %arg7[%c0_65, %c0_66], %331 {strides = array<i32>} : memref<2x32xf32, #tpu.memory_space<vmem>>, vector<2x32xf32>,
    %337 = tpu.concatenate %48, %89, %130, %171, %212, %253, %294, %335 in 1 : vector<2x32xf32>, vector<2x32xf32>, vector<2x32xf32>, vector<2x32xf32>, vector<2x32xf32>, vector<2x32xf32>, vector<2x32xf32>, vector<2x32xf32> -> vector<2x256xf32>
    %c0_67 = arith.constant 0 : index
    %c0_68 = arith.constant 0 : index
    %338 = vector.load %arg5[%c0_67, %c0_68] : memref<2x256xf32, #tpu.memory_space<vmem>>, vector<2x256xf32>
    tpu.vector_store %arg5[%c0_67, %c0_68], %337 {strides = array<i32>} : memref<2x256xf32, #tpu.memory_space<vmem>>, vector<2x256xf32>,
    %c0_i32_69 = arith.constant 0 : i32
    %339 = arith.cmpi eq, %arg0, %c0_i32_69 : i32
    %340 = arith.extui %339 : i1 to i32
    %c0_i32_70 = arith.constant 0 : i32
    %341 = arith.cmpi ne, %340, %c0_i32_70 : i32
    scf.if %341 {
      %c0_71 = arith.constant 0 : index
      %c0_72 = arith.constant 0 : index
      %342 = vector.load %arg6[%c0_71, %c0_72] : memref<2x32xf32, #tpu.memory_space<vmem>>, vector<2x32xf32>
      tpu.vector_store %arg6[%c0_71, %c0_72], %331 {strides = array<i32>} : memref<2x32xf32, #tpu.memory_space<vmem>>, vector<2x32xf32>,
    } else {
    }
    return
  }
  func.func @transform_0(%arg0: i32) -> (i32, i32) {
    %c0_i32 = arith.constant 0 : i32
    %c0_i32_0 = arith.constant 0 : i32
    %c0_i32_1 = arith.constant 0 : i32
    return %c0_i32, %c0_i32_0 : i32, i32
  }
  func.func @transform_1(%arg0: i32) -> (i32, i32, i32) {
    %c0_i32 = arith.constant 0 : i32
    %c0_i32_0 = arith.constant 0 : i32
    %c0_i32_1 = arith.constant 0 : i32
    return %arg0, %c0_i32, %c0_i32_0 : i32, i32, i32
  }
  func.func @transform_2(%arg0: i32) -> (i32, i32) {
    %c0_i32 = arith.constant 0 : i32
    %c0_i32_0 = arith.constant 0 : i32
    %c0_i32_1 = arith.constant 0 : i32
    return %c0_i32, %c0_i32_0 : i32, i32
  }
  func.func @transform_3(%arg0: i32) -> (i32, i32) {
    %c0_i32 = arith.constant 0 : i32
    %c0_i32_0 = arith.constant 0 : i32
    %c0_i32_1 = arith.constant 0 : i32
    return %c0_i32, %c0_i32_0 : i32, i32
  }
  func.func @transform_4(%arg0: i32) -> (i32, i32) {
    %c0_i32 = arith.constant 0 : i32
    %c0_i32_0 = arith.constant 0 : i32
    return %c0_i32, %arg0 : i32, i32
  }
  func.func @transform_5(%arg0: i32) -> (i32, i32) {
    %c0_i32 = arith.constant 0 : i32
    %c0_i32_0 = arith.constant 0 : i32
    %c0_i32_1 = arith.constant 0 : i32
    return %c0_i32, %c0_i32_0 : i32, i32
  }
}

</mosaic_0001>

<llo_original>
// kernel: gru_forward.1
$region0: #{gru_forward.1}
  #allocation0 [shape = 'u32[]', space=smem, size = 0x4, offset = 0x4, fixed_abs, tag = 'smem constant byte address 0x4 - core index']
  #allocation1 [shape = 'u32[144,128]{1,0:T(1,128)}', space=vmem, size = 0x12000, scoped, tag = 'internal scratch']
  #allocation2 [shape = 'f32[2,32]{1,0:T(2,128)}', space=vmem, size = 0x400, scoped, tag = 'scratch operand']
  %s0 = inlined_call_operand.vmem [shape: s32[2,1], index: 0, kind: input, shape index: {}]
  %s1 = inlined_call_operand.vmem [shape: f32[8,2,96], index: 1, kind: input, shape index: {}]
  %s2 = inlined_call_operand.vmem [shape: f32[32,96], index: 2, kind: input, shape index: {}]
  %s3 = inlined_call_operand.vmem [shape: f32[1,96], index: 3, kind: input, shape index: {}]
  %s4 = inlined_call_operand.vmem [shape: f32[2,256], index: 4, kind: output, shape index: {0}]
  %s5 = inlined_call_operand.hbm [shape: f32[2,32], index: 5, kind: output, shape index: {1}]
  %6 = xla_tuple %s4, %s5
  %s7 = sld [smem:[#allocation0]]
  $region42: #{gru_forward.1} parent=0
    _
  %s9 = ssub.s32 1, %s7
  %s10 = scalar_select 0, %s9, %s7
  $region1: #{gru_forward.1} parent=0
    #allocation3 [shape = 'u8[1024]{0}', space=vmem, size = 0x400, scoped, tag = 'output window, operand 1, single buffered']
    #allocation4 [shape = 's32[1]{0}', space=sflag, size = 0x4, scoped, tag = 'scoped memory for gru_forward.1']
    %11 = vsyncpa [#allocation4], 0
    // Predicated region
    $region2: #{gru_forward.1} parent=1 // pred_check
      _
    $region3: #{gru_forward.1} parent=1 // pred_check_branch
      %13 = sbr.rel (0) target = $region5
    $region4: #{gru_forward.1} parent=1 // pred_region
      _
    $region5: #{gru_forward.1} parent=1 // pred_fallthru
      _
    // Predicated region
    $region6: #{gru_forward.1} parent=1 // pred_check
      _
    $region7: #{gru_forward.1} parent=1 // pred_check_branch
      %15 = sbr.rel (0) target = $region9
    $region8: #{gru_forward.1} parent=1 // pred_region
      _
    $region9: #{gru_forward.1} parent=1 // pred_fallthru
      _
    // Predicated region
    $region10: #{gru_forward.1} parent=1 // pred_check
      _
    $region11: #{gru_forward.1} parent=1 // pred_check_branch
      %17 = sbr.rel (0) target = $region13
    $region12: #{gru_forward.1} parent=1 // pred_region
      _
    $region13: #{gru_forward.1} parent=1 // pred_fallthru
      _
    // Predicated region
    $region14: #{gru_forward.1} parent=1 // pred_check
      _
    $region15: #{gru_forward.1} parent=1 // pred_check_branch
      %19 = sbr.rel (0) target = $region17
    $region16: #{gru_forward.1} parent=1 // pred_region
      _
    $region17: #{gru_forward.1} parent=1 // pred_fallthru
      _
    %p20 = scmp.eq.s32.totalorder 0, 0
    // Predicated region
    $region18: #{gru_forward.1} parent=1 // pred_check
      %p21 = pneg %p20
    $region19: #{gru_forward.1} parent=1 // pred_check_branch
      %23 = sbr.rel (%p21) target = $region21
    $region20: #{gru_forward.1} parent=1 // pred_region
      %vm24 = vcmask 254976
      %25 = vst.msk [vmem:[#allocation2] sm:$0x3] %vm24, 0.0
    $region21: #{gru_forward.1} parent=1 // pred_fallthru
      _
    %v26 = vld [vmem:[%s0] sm:$0x3]
    %v27 = vld [vmem:[%s2] sm:$0xff]
    %v28 = vld [vmem:[%s2 + $0x8] sm:$0xff]
    %v29 = vld [vmem:[%s2 + $0x10] sm:$0xff]
    %v30 = vld [vmem:[%s2 + $0x18] sm:$0xff]
    %v31 = vld [vmem:[%s3] sm:$0x1]
    %s32 = smul.u32 0, 8
    %v33 = vld [vmem:[#allocation2] sm:$0x3]
    %v34 = vld [vmem:[%s1] sm:$0x3]
    %v36 = vlaneseq
    %v37 = vshrl.u32 %v36, 7
    %v38 = vsub.s32 0, %v37
    %v39 = vrot.slane %v31, %v38
    %vm41 = vcmask 261120
    %v43 = vsel %vm41, %v33, 0
    %45 = vmatprep.subr.mxu0 0.0
    %46 = vmatpush1.msra.mxu0 %v27
    %47 = vmatprep.subr.mxu0 0.0
    %48 = vmatpush1.msra.mxu0 %v28
    %49 = vmatprep.subr.mxu0 0.0
    %50 = vmatpush1.msra.mxu0 %v29
    %51 = vmatprep.subr.mxu0 0.0
    %52 = vmatpush1.msra.mxu0 %v30
    %53 = vmatprep.subr.mxu0 0.0
    %54 = vmatpush1.msra.mxu0 0.0
    %55 = vmatprep.subr.mxu0 0.0
    %56 = vmatpush1.msra.mxu0 0.0
    %57 = vmatprep.subr.mxu0 0.0
    %58 = vmatpush1.msra.mxu0 0.0
    %59 = vmatprep.subr.mxu0 0.0
    %60 = vmatpush1.msra.mxu0 0.0
    %61 = vmatprep.subr.mxu0 0.0
    %62 = vmatpush1.msra.mxu0 0.0
    %63 = vmatprep.subr.mxu0 0.0
    %64 = vmatpush1.msra.mxu0 0.0
    %65 = vmatprep.subr.mxu0 0.0
    %66 = vmatpush1.msra.mxu0 0.0
    %67 = vmatprep.subr.mxu0 0.0
    %68 = vmatpush1.msra.mxu0 0.0
    %69 = vmatprep.subr.mxu0 0.0
    %70 = vmatpush1.msra.mxu0 0.0
    %71 = vmatprep.subr.mxu0 0.0
    %72 = vmatpush1.msra.mxu0 0.0
    %73 = vmatprep.subr.mxu0 0.0
    %74 = vmatpush1.msra.mxu0 0.0
    %75 = vmatprep.subr.mxu0 0.0
    %76 = vmatpush1.msra.mxu0 0.0
    %77 = vmatprep.subr.mxu0 0.0
    %78 = vmatpush1.msra.mxu0 0.0
    %79 = vmatprep.subr.mxu0 0.0
    %80 = vmatpush1.msra.mxu0 0.0
    %81 = vmatprep.subr.mxu0 0.0
    %82 = vmatpush1.msra.mxu0 0.0
    %83 = vmatprep.subr.mxu0 0.0
    %84 = vmatpush1.msra.mxu0 0.0
    %85 = vmatprep.subr.mxu0 0.0
    %86 = vmatpush1.msra.mxu0 0.0
    %87 = vmatprep.subr.mxu0 0.0
    %88 = vmatpush1.msra.mxu0 0.0
    %89 = vmatprep.subr.mxu0 0.0
    %90 = vmatpush1.msra.mxu0 0.0
    %91 = vmatprep.subr.mxu0 0.0
    %92 = vmatpush1.msra.mxu0 0.0
    %93 = vmatprep.subr.mxu0 0.0
    %94 = vmatpush1.msra.mxu0 0.0
    %95 = vmatprep.subr.mxu0 0.0
    %96 = vmatpush1.msra.mxu0 0.0
    %97 = vmatprep.subr.mxu0 0.0
    %98 = vmatpush1.msra.mxu0 0.0
    %99 = vmatprep.subr.mxu0 0.0
    %100 = vmatpush1.msra.mxu0 0.0
    %101 = vmatprep.subr.mxu0 0.0
    %102 = vmatpush1.msra.mxu0 0.0
    %103 = vmatprep.subr.mxu0 0.0
    %104 = vmatpush1.msra.mxu0 0.0
    %105 = vmatprep.subr.mxu0 0.0
    %106 = vmatpush1.msra.mxu0 0.0
    %107 = vmatprep.subr.mxu0 0.0
    %108 = vmatpush1.msra.mxu0 0.0
    %109 = vmatprep.mubr.f32.mxu0 0.0
    %110 = vmatmul.mubr.f32.gmra.mrb[0].mxu0 %v43
    %v111 = vpop.f32.mrb[0].mxu0
    %v112 = vadd.f32 %v39, %v111
    %v113 = vpop.f32.mrb[0].mxu0
    %114 = vdwg.mxu0
    %v115 = vadd.f32 %v34, %v112
    %v116 = vxor.u32 %v115, 2147483648
    %v117 = vmul.f32 %v116, 1.442695
    %v118 = vpow.pop %v117
    %v119 = vadd.f32 %v118, 1.0
    %v120 = vrcp.pop %v119
    %v121 = vmul.f32 1.0, %v120
    %123 = vrot.lane.b32.xlu0 %v112, 64
    %v124 = vpop.permute.xlu0 %123
    %v126 = vmul.f32 %v121, %v124
    %128 = vrot.lane.b32.xlu0 %v126, 64
    %v129 = vpop.permute.xlu0 %128
    %v131 = vadd.f32 %v34, %v129
    %v132 = vtanh.pop %v131
    %v133 = vsub.f32 1.0, %v121
    %135 = vrot.lane.b32.xlu0 %v132, 96
    %v136 = vpop.permute.xlu0 %135
    %v138 = vmul.f32 %v133, %v136
    %139 = vrot.lane.b32.xlu0 %v33, 32
    %v140 = vpop.permute.xlu0 %139
    %v142 = vmul.f32 %v121, %v140
    %v143 = vadd.f32 %v138, %v142
    %v144 = vstv %s32
    %vm145 = vcmp.lt.s32.totalorder %v144, %v26
    %v146 = vsel %vm145, 1, 0
    %147 = vset.pattern.permute.xlu0 0
    %148 = vperm.xlu0 %147, %v146
    %v149 = vpop.permute.xlu0 %148
    %vm150 = vcmp.eq.s32.totalorder %v149, 1
    %v151 = vsel %vm150, %v143, %v140
    %v152 = vsel %vm150, %v143, 0.0
    %s153 = scalar_lea.vmem %s1, 2
    %v154 = vld [vmem:[%s153] sm:$0x3]
    %156 = vrot.lane.b32.xlu0 %v151, 96
    %v157 = vpop.permute.xlu0 %156
    %v158 = vsel %vm41, %v157, 0
    %160 = vmatprep.subr.mxu0 0.0
    %161 = vmatpush1.msra.mxu0 %v27
    %162 = vmatprep.subr.mxu0 0.0
    %163 = vmatpush1.msra.mxu0 %v28
    %164 = vmatprep.subr.mxu0 0.0
    %165 = vmatpush1.msra.mxu0 %v29
    %166 = vmatprep.subr.mxu0 0.0
    %167 = vmatpush1.msra.mxu0 %v30
    %168 = vmatprep.subr.mxu0 0.0
    %169 = vmatpush1.msra.mxu0 0.0
    %170 = vmatprep.subr.mxu0 0.0
    %171 = vmatpush1.msra.mxu0 0.0
    %172 = vmatprep.subr.mxu0 0.0
    %173 = vmatpush1.msra.mxu0 0.0
    %174 = vmatprep.subr.mxu0 0.0
    %175 = vmatpush1.msra.mxu0 0.0
    %176 = vmatprep.subr.mxu0 0.0
    %177 = vmatpush1.msra.mxu0 0.0
    %178 = vmatprep.subr.mxu0 0.0
    %179 = vmatpush1.msra.mxu0 0.0
    %180 = vmatprep.subr.mxu0 0.0
    %181 = vmatpush1.msra.mxu0 0.0
    %182 = vmatprep.subr.mxu0 0.0
    %183 = vmatpush1.msra.mxu0 0.0
    %184 = vmatprep.subr.mxu0 0.0
    %185 = vmatpush1.msra.mxu0 0.0
    %186 = vmatprep.subr.mxu0 0.0
    %187 = vmatpush1.msra.mxu0 0.0
    %188 = vmatprep.subr.mxu0 0.0
    %189 = vmatpush1.msra.mxu0 0.0
    %190 = vmatprep.subr.mxu0 0.0
    %191 = vmatpush1.msra.mxu0 0.0
    %192 = vmatprep.subr.mxu0 0.0
    %193 = vmatpush1.msra.mxu0 0.0
    %194 = vmatprep.subr.mxu0 0.0
    %195 = vmatpush1.msra.mxu0 0.0
    %196 = vmatprep.subr.mxu0 0.0
    %197 = vmatpush1.msra.mxu0 0.0
    %198 = vmatprep.subr.mxu0 0.0
    %199 = vmatpush1.msra.mxu0 0.0
    %200 = vmatprep.subr.mxu0 0.0
    %201 = vmatpush1.msra.mxu0 0.0
    %202 = vmatprep.subr.mxu0 0.0
    %203 = vmatpush1.msra.mxu0 0.0
    %204 = vmatprep.subr.mxu0 0.0
    %205 = vmatpush1.msra.mxu0 0.0
    %206 = vmatprep.subr.mxu0 0.0
    %207 = vmatpush1.msra.mxu0 0.0
    %208 = vmatprep.subr.mxu0 0.0
    %209 = vmatpush1.msra.mxu0 0.0
    %210 = vmatprep.subr.mxu0 0.0
    %211 = vmatpush1.msra.mxu0 0.0
    %212 = vmatprep.subr.mxu0 0.0
    %213 = vmatpush1.msra.mxu0 0.0
    %214 = vmatprep.subr.mxu0 0.0
    %215 = vmatpush1.msra.mxu0 0.0
    %216 = vmatprep.subr.mxu0 0.0
    %217 = vmatpush1.msra.mxu0 0.0
    %218 = vmatprep.subr.mxu0 0.0
    %219 = vmatpush1.msra.mxu0 0.0
    %220 = vmatprep.subr.mxu0 0.0
    %221 = vmatpush1.msra.mxu0 0.0
    %222 = vmatprep.subr.mxu0 0.0
    %223 = vmatpush1.msra.mxu0 0.0
    %224 = vmatprep.mubr.f32.mxu0 0.0
    %225 = vmatmul.mubr.f32.gmra.mrb[0].mxu0 %v158
    %v226 = vpop.f32.mrb[0].mxu0
    %v227 = vadd.f32 %v39, %v226
    %v228 = vpop.f32.mrb[0].mxu0
    %229 = vdwg.mxu0
    %v230 = vadd.f32 %v154, %v227
    %v231 = vxor.u32 %v230, 2147483648
    %v232 = vmul.f32 %v231, 1.442695
    %v233 = vpow.pop %v232
    %v234 = vadd.f32 %v233, 1.0
    %v235 = vrcp.pop %v234
    %v236 = vmul.f32 1.0, %v235
    %238 = vrot.lane.b32.xlu0 %v227, 64
    %v239 = vpop.permute.xlu0 %238
    %v241 = vmul.f32 %v236, %v239
    %243 = vrot.lane.b32.xlu0 %v241, 64
    %v244 = vpop.permute.xlu0 %243
    %v246 = vadd.f32 %v154, %v244
    %v247 = vtanh.pop %v246
    %v248 = vsub.f32 1.0, %v236
    %250 = vrot.lane.b32.xlu0 %v247, 96
    %v251 = vpop.permute.xlu0 %250
    %v253 = vmul.f32 %v248, %v251
    %v254 = vmul.f32 %v236, %v151
    %v255 = vadd.f32 %v253, %v254
    %s256 = sadd.s32 %s32, 1
    %v257 = vstv %s256
    %vm258 = vcmp.lt.s32.totalorder %v257, %v26
    %v259 = vsel %vm258, 1, 0
    %260 = vset.pattern.permute.xlu0 0
    %261 = vperm.xlu0 %260, %v259
    %v262 = vpop.permute.xlu0 %261
    %vm263 = vcmp.eq.s32.totalorder %v262, 1
    %v264 = vsel %vm263, %v255, %v151
    %v265 = vsel %vm263, %v255, 0.0
    %s266 = scalar_lea.vmem %s1, 4
    %v267 = vld [vmem:[%s266] sm:$0x3]
    %269 = vrot.lane.b32.xlu0 %v264, 96
    %v270 = vpop.permute.xlu0 %269
    %v271 = vsel %vm41, %v270, 0
    %273 = vmatprep.subr.mxu0 0.0
    %274 = vmatpush1.msra.mxu0 %v27
    %275 = vmatprep.subr.mxu0 0.0
    %276 = vmatpush1.msra.mxu0 %v28
    %277 = vmatprep.subr.mxu0 0.0
    %278 = vmatpush1.msra.mxu0 %v29
    %279 = vmatprep.subr.mxu0 0.0
    %280 = vmatpush1.msra.mxu0 %v30
    %281 = vmatprep.subr.mxu0 0.0
    %282 = vmatpush1.msra.mxu0 0.0
    %283 = vmatprep.subr.mxu0 0.0
    %284 = vmatpush1.msra.mxu0 0.0
    %285 = vmatprep.subr.mxu0 0.0
    %286 = vmatpush1.msra.mxu0 0.0
    %287 = vmatprep.subr.mxu0 0.0
    %288 = vmatpush1.msra.mxu0 0.0
    %289 = vmatprep.subr.mxu0 0.0
    %290 = vmatpush1.msra.mxu0 0.0
    %291 = vmatprep.subr.mxu0 0.0
    %292 = vmatpush1.msra.mxu0 0.0
    %293 = vmatprep.subr.mxu0 0.0
    %294 = vmatpush1.msra.mxu0 0.0
    %295 = vmatprep.subr.mxu0 0.0
    %296 = vmatpush1.msra.mxu0 0.0
    %297 = vmatprep.subr.mxu0 0.0
    %298 = vmatpush1.msra.mxu0 0.0
    %299 = vmatprep.subr.mxu0 0.0
    %300 = vmatpush1.msra.mxu0 0.0
    %301 = vmatprep.subr.mxu0 0.0
    %302 = vmatpush1.msra.mxu0 0.0
    %303 = vmatprep.subr.mxu0 0.0
    %304 = vmatpush1.msra.mxu0 0.0
    %305 = vmatprep.subr.mxu0 0.0
    %306 = vmatpush1.msra.mxu0 0.0
    %307 = vmatprep.subr.mxu0 0.0
    %308 = vmatpush1.msra.mxu0 0.0
    %309 = vmatprep.subr.mxu0 0.0
    %310 = vmatpush1.msra.mxu0 0.0
    %311 = vmatprep.subr.mxu0 0.0
    %312 = vmatpush1.msra.mxu0 0.0
    %313 = vmatprep.subr.mxu0 0.0
    %314 = vmatpush1.msra.mxu0 0.0
    %315 = vmatprep.subr.mxu0 0.0
    %316 = vmatpush1.msra.mxu0 0.0
    %317 = vmatprep.subr.mxu0 0.0
    %318 = vmatpush1.msra.mxu0 0.0
    %319 = vmatprep.subr.mxu0 0.0
    %320 = vmatpush1.msra.mxu0 0.0
    %321 = vmatprep.subr.mxu0 0.0
    %322 = vmatpush1.msra.mxu0 0.0
    %323 = vmatprep.subr.mxu0 0.0
    %324 = vmatpush1.msra.mxu0 0.0
    %325 = vmatprep.subr.mxu0 0.0
    %326 = vmatpush1.msra.mxu0 0.0
    %327 = vmatprep.subr.mxu0 0.0
    %328 = vmatpush1.msra.mxu0 0.0
    %329 = vmatprep.subr.mxu0 0.0
    %330 = vmatpush1.msra.mxu0 0.0
    %331 = vmatprep.subr.mxu0 0.0
    %332 = vmatpush1.msra.mxu0 0.0
    %333 = vmatprep.subr.mxu0 0.0
    %334 = vmatpush1.msra.mxu0 0.0
    %335 = vmatprep.subr.mxu0 0.0
    %336 = vmatpush1.msra.mxu0 0.0
    %337 = vmatprep.mubr.f32.mxu0 0.0
    %338 = vmatmul.mubr.f32.gmra.mrb[0].mxu0 %v271
    %v339 = vpop.f32.mrb[0].mxu0
    %v340 = vadd.f32 %v39, %v339
    %v341 = vpop.f32.mrb[0].mxu0
    %342 = vdwg.mxu0
    %v343 = vadd.f32 %v267, %v340
    %v344 = vxor.u32 %v343, 2147483648
    %v345 = vmul.f32 %v344, 1.442695
    %v346 = vpow.pop %v345
    %v347 = vadd.f32 %v346, 1.0
    %v348 = vrcp.pop %v347
    %v349 = vmul.f32 1.0, %v348
    %351 = vrot.lane.b32.xlu0 %v340, 64
    %v352 = vpop.permute.xlu0 %351
    %v354 = vmul.f32 %v349, %v352
    %356 = vrot.lane.b32.xlu0 %v354, 64
    %v357 = vpop.permute.xlu0 %356
    %v359 = vadd.f32 %v267, %v357
    %v360 = vtanh.pop %v359
    %v361 = vsub.f32 1.0, %v349
    %363 = vrot.lane.b32.xlu0 %v360, 96
    %v364 = vpop.permute.xlu0 %363
    %v366 = vmul.f32 %v361, %v364
    %v367 = vmul.f32 %v349, %v264
    %v368 = vadd.f32 %v366, %v367
    %s369 = sadd.s32 %s32, 2
    %v370 = vstv %s369
    %vm371 = vcmp.lt.s32.totalorder %v370, %v26
    %v372 = vsel %vm371, 1, 0
    %373 = vset.pattern.permute.xlu0 0
    %374 = vperm.xlu0 %373, %v372
    %v375 = vpop.permute.xlu0 %374
    %vm376 = vcmp.eq.s32.totalorder %v375, 1
    %v377 = vsel %vm376, %v368, %v264
    %v378 = vsel %vm376, %v368, 0.0
    %s379 = scalar_lea.vmem %s1, 6
    %v380 = vld [vmem:[%s379] sm:$0x3]
    %382 = vrot.lane.b32.xlu0 %v377, 96
    %v383 = vpop.permute.xlu0 %382
    %v384 = vsel %vm41, %v383, 0
    %386 = vmatprep.subr.mxu0 0.0
    %387 = vmatpush1.msra.mxu0 %v27
    %388 = vmatprep.subr.mxu0 0.0
    %389 = vmatpush1.msra.mxu0 %v28
    %390 = vmatprep.subr.mxu0 0.0
    %391 = vmatpush1.msra.mxu0 %v29
    %392 = vmatprep.subr.mxu0 0.0
    %393 = vmatpush1.msra.mxu0 %v30
    %394 = vmatprep.subr.mxu0 0.0
    %395 = vmatpush1.msra.mxu0 0.0
    %396 = vmatprep.subr.mxu0 0.0
    %397 = vmatpush1.msra.mxu0 0.0
    %398 = vmatprep.subr.mxu0 0.0
    %399 = vmatpush1.msra.mxu0 0.0
    %400 = vmatprep.subr.mxu0 0.0
    %401 = vmatpush1.msra.mxu0 0.0
    %402 = vmatprep.subr.mxu0 0.0
    %403 = vmatpush1.msra.mxu0 0.0
    %404 = vmatprep.subr.mxu0 0.0
    %405 = vmatpush1.msra.mxu0 0.0
    %406 = vmatprep.subr.mxu0 0.0
    %407 = vmatpush1.msra.mxu0 0.0
    %408 = vmatprep.subr.mxu0 0.0
    %409 = vmatpush1.msra.mxu0 0.0
    %410 = vmatprep.subr.mxu0 0.0
    %411 = vmatpush1.msra.mxu0 0.0
    %412 = vmatprep.subr.mxu0 0.0
    %413 = vmatpush1.msra.mxu0 0.0
    %414 = vmatprep.subr.mxu0 0.0
    %415 = vmatpush1.msra.mxu0 0.0
    %416 = vmatprep.subr.mxu0 0.0
    %417 = vmatpush1.msra.mxu0 0.0
    %418 = vmatprep.subr.mxu0 0.0
    %419 = vmatpush1.msra.mxu0 0.0
    %420 = vmatprep.subr.mxu0 0.0
    %421 = vmatpush1.msra.mxu0 0.0
    %422 = vmatprep.subr.mxu0 0.0
    %423 = vmatpush1.msra.mxu0 0.0
    %424 = vmatprep.subr.mxu0 0.0
    %425 = vmatpush1.msra.mxu0 0.0
    %426 = vmatprep.subr.mxu0 0.0
    %427 = vmatpush1.msra.mxu0 0.0
    %428 = vmatprep.subr.mxu0 0.0
    %429 = vmatpush1.msra.mxu0 0.0
    %430 = vmatprep.subr.mxu0 0.0
    %431 = vmatpush1.msra.mxu0 0.0
    %432 = vmatprep.subr.mxu0 0.0
    %433 = vmatpush1.msra.mxu0 0.0
    %434 = vmatprep.subr.mxu0 0.0
    %435 = vmatpush1.msra.mxu0 0.0
    %436 = vmatprep.subr.mxu0 0.0
    %437 = vmatpush1.msra.mxu0 0.0
    %438 = vmatprep.subr.mxu0 0.0
    %439 = vmatpush1.msra.mxu0 0.0
    %440 = vmatprep.subr.mxu0 0.0
    %441 = vmatpush1.msra.mxu0 0.0
    %442 = vmatprep.subr.mxu0 0.0
    %443 = vmatpush1.msra.mxu0 0.0
    %444 = vmatprep.subr.mxu0 0.0
    %445 = vmatpush1.msra.mxu0 0.0
    %446 = vmatprep.subr.mxu0 0.0
    %447 = vmatpush1.msra.mxu0 0.0
    %448 = vmatprep.subr.mxu0 0.0
    %449 = vmatpush1.msra.mxu0 0.0
    %450 = vmatprep.mubr.f32.mxu0 0.0
    %451 = vmatmul.mubr.f32.gmra.mrb[0].mxu0 %v384
    %v452 = vpop.f32.mrb[0].mxu0
    %v453 = vadd.f32 %v39, %v452
    %v454 = vpop.f32.mrb[0].mxu0
    %455 = vdwg.mxu0
    %v456 = vadd.f32 %v380, %v453
    %v457 = vxor.u32 %v456, 2147483648
    %v458 = vmul.f32 %v457, 1.442695
    %v459 = vpow.pop %v458
    %v460 = vadd.f32 %v459, 1.0
    %v461 = vrcp.pop %v460
    %v462 = vmul.f32 1.0, %v461
    %464 = vrot.lane.b32.xlu0 %v453, 64
    %v465 = vpop.permute.xlu0 %464
    %v467 = vmul.f32 %v462, %v465
    %469 = vrot.lane.b32.xlu0 %v467, 64
    %v470 = vpop.permute.xlu0 %469
    %v472 = vadd.f32 %v380, %v470
    %v473 = vtanh.pop %v472
    %v474 = vsub.f32 1.0, %v462
    %476 = vrot.lane.b32.xlu0 %v473, 96
    %v477 = vpop.permute.xlu0 %476
    %v479 = vmul.f32 %v474, %v477
    %v480 = vmul.f32 %v462, %v377
    %v481 = vadd.f32 %v479, %v480
    %s482 = sadd.s32 %s32, 3
    %v483 = vstv %s482
    %vm484 = vcmp.lt.s32.totalorder %v483, %v26
    %v485 = vsel %vm484, 1, 0
    %486 = vset.pattern.permute.xlu0 0
    %487 = vperm.xlu0 %486, %v485
    %v488 = vpop.permute.xlu0 %487
    %vm489 = vcmp.eq.s32.totalorder %v488, 1
    %v490 = vsel %vm489, %v481, %v377
    %v491 = vsel %vm489, %v481, 0.0
    %s492 = scalar_lea.vmem %s1, 8
    %v493 = vld [vmem:[%s492] sm:$0x3]
    %495 = vrot.lane.b32.xlu0 %v490, 96
    %v496 = vpop.permute.xlu0 %495
    %v497 = vsel %vm41, %v496, 0
    %499 = vmatprep.subr.mxu0 0.0
    %500 = vmatpush1.msra.mxu0 %v27
    %501 = vmatprep.subr.mxu0 0.0
    %502 = vmatpush1.msra.mxu0 %v28
    %503 = vmatprep.subr.mxu0 0.0
    %504 = vmatpush1.msra.mxu0 %v29
    %505 = vmatprep.subr.mxu0 0.0
    %506 = vmatpush1.msra.mxu0 %v30
    %507 = vmatprep.subr.mxu0 0.0
    %508 = vmatpush1.msra.mxu0 0.0
    %509 = vmatprep.subr.mxu0 0.0
    %510 = vmatpush1.msra.mxu0 0.0
    %511 = vmatprep.subr.mxu0 0.0
    %512 = vmatpush1.msra.mxu0 0.0
    %513 = vmatprep.subr.mxu0 0.0
    %514 = vmatpush1.msra.mxu0 0.0
    %515 = vmatprep.subr.mxu0 0.0
    %516 = vmatpush1.msra.mxu0 0.0
    %517 = vmatprep.subr.mxu0 0.0
    %518 = vmatpush1.msra.mxu0 0.0
    %519 = vmatprep.subr.mxu0 0.0
    %520 = vmatpush1.msra.mxu0 0.0
    %521 = vmatprep.subr.mxu0 0.0
    %522 = vmatpush1.msra.mxu0 0.0
    %523 = vmatprep.subr.mxu0 0.0
    %524 = vmatpush1.msra.mxu0 0.0
    %525 = vmatprep.subr.mxu0 0.0
    %526 = vmatpush1.msra.mxu0 0.0
    %527 = vmatprep.subr.mxu0 0.0
    %528 = vmatpush1.msra.mxu0 0.0
    %529 = vmatprep.subr.mxu0 0.0
    %530 = vmatpush1.msra.mxu0 0.0
    %531 = vmatprep.subr.mxu0 0.0
    %532 = vmatpush1.msra.mxu0 0.0
    %533 = vmatprep.subr.mxu0 0.0
    %534 = vmatpush1.msra.mxu0 0.0
    %535 = vmatprep.subr.mxu0 0.0
    %536 = vmatpush1.msra.mxu0 0.0
    %537 = vmatprep.subr.mxu0 0.0
    %538 = vmatpush1.msra.mxu0 0.0
    %539 = vmatprep.subr.mxu0 0.0
    %540 = vmatpush1.msra.mxu0 0.0
    %541 = vmatprep.subr.mxu0 0.0
    %542 = vmatpush1.msra.mxu0 0.0
    %543 = vmatprep.subr.mxu0 0.0
    %544 = vmatpush1.msra.mxu0 0.0
    %545 = vmatprep.subr.mxu0 0.0
    %546 = vmatpush1.msra.mxu0 0.0
    %547 = vmatprep.subr.mxu0 0.0
    %548 = vmatpush1.msra.mxu0 0.0
    %549 = vmatprep.subr.mxu0 0.0
    %550 = vmatpush1.msra.mxu0 0.0
    %551 = vmatprep.subr.mxu0 0.0
    %552 = vmatpush1.msra.mxu0 0.0
    %553 = vmatprep.subr.mxu0 0.0
    %554 = vmatpush1.msra.mxu0 0.0
    %555 = vmatprep.subr.mxu0 0.0
    %556 = vmatpush1.msra.mxu0 0.0
    %557 = vmatprep.subr.mxu0 0.0
    %558 = vmatpush1.msra.mxu0 0.0
    %559 = vmatprep.subr.mxu0 0.0
    %560 = vmatpush1.msra.mxu0 0.0
    %561 = vmatprep.subr.mxu0 0.0
    %562 = vmatpush1.msra.mxu0 0.0
    %563 = vmatprep.mubr.f32.mxu0 0.0
    %564 = vmatmul.mubr.f32.gmra.mrb[0].mxu0 %v497
    %v565 = vpop.f32.mrb[0].mxu0
    %v566 = vadd.f32 %v39, %v565
    %v567 = vpop.f32.mrb[0].mxu0
    %568 = vdwg.mxu0
    %v569 = vadd.f32 %v493, %v566
    %v570 = vxor.u32 %v569, 2147483648
    %v571 = vmul.f32 %v570, 1.442695
    %v572 = vpow.pop %v571
    %v573 = vadd.f32 %v572, 1.0
    %v574 = vrcp.pop %v573
    %v575 = vmul.f32 1.0, %v574
    %577 = vrot.lane.b32.xlu0 %v566, 64
    %v578 = vpop.permute.xlu0 %577
    %v580 = vmul.f32 %v575, %v578
    %582 = vrot.lane.b32.xlu0 %v580, 64
    %v583 = vpop.permute.xlu0 %582
    %v585 = vadd.f32 %v493, %v583
    %v586 = vtanh.pop %v585
    %v587 = vsub.f32 1.0, %v575
    %589 = vrot.lane.b32.xlu0 %v586, 96
    %v590 = vpop.permute.xlu0 %589
    %v592 = vmul.f32 %v587, %v590
    %v593 = vmul.f32 %v575, %v490
    %v594 = vadd.f32 %v592, %v593
    %s595 = sadd.s32 %s32, 4
    %v596 = vstv %s595
    %vm597 = vcmp.lt.s32.totalorder %v596, %v26
    %v598 = vsel %vm597, 1, 0
    %599 = vset.pattern.permute.xlu0 0
    %600 = vperm.xlu0 %599, %v598
    %v601 = vpop.permute.xlu0 %600
    %vm602 = vcmp.eq.s32.totalorder %v601, 1
    %v603 = vsel %vm602, %v594, %v490
    %v604 = vsel %vm602, %v594, 0.0
    %s605 = scalar_lea.vmem %s1, 10
    %v606 = vld [vmem:[%s605] sm:$0x3]
    %608 = vrot.lane.b32.xlu0 %v603, 96
    %v609 = vpop.permute.xlu0 %608
    %v610 = vsel %vm41, %v609, 0
    %612 = vmatprep.subr.mxu0 0.0
    %613 = vmatpush1.msra.mxu0 %v27
    %614 = vmatprep.subr.mxu0 0.0
    %615 = vmatpush1.msra.mxu0 %v28
    %616 = vmatprep.subr.mxu0 0.0
    %617 = vmatpush1.msra.mxu0 %v29
    %618 = vmatprep.subr.mxu0 0.0
    %619 = vmatpush1.msra.mxu0 %v30
    %620 = vmatprep.subr.mxu0 0.0
    %621 = vmatpush1.msra.mxu0 0.0
    %622 = vmatprep.subr.mxu0 0.0
    %623 = vmatpush1.msra.mxu0 0.0
    %624 = vmatprep.subr.mxu0 0.0
    %625 = vmatpush1.msra.mxu0 0.0
    %626 = vmatprep.subr.mxu0 0.0
    %627 = vmatpush1.msra.mxu0 0.0
    %628 = vmatprep.subr.mxu0 0.0
    %629 = vmatpush1.msra.mxu0 0.0
    %630 = vmatprep.subr.mxu0 0.0
    %631 = vmatpush1.msra.mxu0 0.0
    %632 = vmatprep.subr.mxu0 0.0
    %633 = vmatpush1.msra.mxu0 0.0
    %634 = vmatprep.subr.mxu0 0.0
    %635 = vmatpush1.msra.mxu0 0.0
    %636 = vmatprep.subr.mxu0 0.0
    %637 = vmatpush1.msra.mxu0 0.0
    %638 = vmatprep.subr.mxu0 0.0
    %639 = vmatpush1.msra.mxu0 0.0
    %640 = vmatprep.subr.mxu0 0.0
    %641 = vmatpush1.msra.mxu0 0.0
    %642 = vmatprep.subr.mxu0 0.0
    %643 = vmatpush1.msra.mxu0 0.0
    %644 = vmatprep.subr.mxu0 0.0
    %645 = vmatpush1.msra.mxu0 0.0
    %646 = vmatprep.subr.mxu0 0.0
    %647 = vmatpush1.msra.mxu0 0.0
    %648 = vmatprep.subr.mxu0 0.0
    %649 = vmatpush1.msra.mxu0 0.0
    %650 = vmatprep.subr.mxu0 0.0
    %651 = vmatpush1.msra.mxu0 0.0
    %652 = vmatprep.subr.mxu0 0.0
    %653 = vmatpush1.msra.mxu0 0.0
    %654 = vmatprep.subr.mxu0 0.0
    %655 = vmatpush1.msra.mxu0 0.0
    %656 = vmatprep.subr.mxu0 0.0
    %657 = vmatpush1.msra.mxu0 0.0
    %658 = vmatprep.subr.mxu0 0.0
    %659 = vmatpush1.msra.mxu0 0.0
    %660 = vmatprep.subr.mxu0 0.0
    %661 = vmatpush1.msra.mxu0 0.0
    %662 = vmatprep.subr.mxu0 0.0
    %663 = vmatpush1.msra.mxu0 0.0
    %664 = vmatprep.subr.mxu0 0.0
    %665 = vmatpush1.msra.mxu0 0.0
    %666 = vmatprep.subr.mxu0 0.0
    %667 = vmatpush1.msra.mxu0 0.0
    %668 = vmatprep.subr.mxu0 0.0
    %669 = vmatpush1.msra.mxu0 0.0
    %670 = vmatprep.subr.mxu0 0.0
    %671 = vmatpush1.msra.mxu0 0.0
    %672 = vmatprep.subr.mxu0 0.0
    %673 = vmatpush1.msra.mxu0 0.0
    %674 = vmatprep.subr.mxu0 0.0
    %675 = vmatpush1.msra.mxu0 0.0
    %676 = vmatprep.mubr.f32.mxu0 0.0
    %677 = vmatmul.mubr.f32.gmra.mrb[0].mxu0 %v610
    %v678 = vpop.f32.mrb[0].mxu0
    %v679 = vadd.f32 %v39, %v678
    %v680 = vpop.f32.mrb[0].mxu0
    %681 = vdwg.mxu0
    %v682 = vadd.f32 %v606, %v679
    %v683 = vxor.u32 %v682, 2147483648
    %v684 = vmul.f32 %v683, 1.442695
    %v685 = vpow.pop %v684
    %v686 = vadd.f32 %v685, 1.0
    %v687 = vrcp.pop %v686
    %v688 = vmul.f32 1.0, %v687
    %690 = vrot.lane.b32.xlu0 %v679, 64
    %v691 = vpop.permute.xlu0 %690
    %v693 = vmul.f32 %v688, %v691
    %695 = vrot.lane.b32.xlu0 %v693, 64
    %v696 = vpop.permute.xlu0 %695
    %v698 = vadd.f32 %v606, %v696
    %v699 = vtanh.pop %v698
    %v700 = vsub.f32 1.0, %v688
    %702 = vrot.lane.b32.xlu0 %v699, 96
    %v703 = vpop.permute.xlu0 %702
    %v705 = vmul.f32 %v700, %v703
    %v706 = vmul.f32 %v688, %v603
    %v707 = vadd.f32 %v705, %v706
    %s708 = sadd.s32 %s32, 5
    %v709 = vstv %s708
    %vm710 = vcmp.lt.s32.totalorder %v709, %v26
    %v711 = vsel %vm710, 1, 0
    %712 = vset.pattern.permute.xlu0 0
    %713 = vperm.xlu0 %712, %v711
    %v714 = vpop.permute.xlu0 %713
    %vm715 = vcmp.eq.s32.totalorder %v714, 1
    %v716 = vsel %vm715, %v707, %v603
    %v717 = vsel %vm715, %v707, 0.0
    %s718 = scalar_lea.vmem %s1, 12
    %v719 = vld [vmem:[%s718] sm:$0x3]
    %721 = vrot.lane.b32.xlu0 %v716, 96
    %v722 = vpop.permute.xlu0 %721
    %v723 = vsel %vm41, %v722, 0
    %725 = vmatprep.subr.mxu0 0.0
    %726 = vmatpush1.msra.mxu0 %v27
    %727 = vmatprep.subr.mxu0 0.0
    %728 = vmatpush1.msra.mxu0 %v28
    %729 = vmatprep.subr.mxu0 0.0
    %730 = vmatpush1.msra.mxu0 %v29
    %731 = vmatprep.subr.mxu0 0.0
    %732 = vmatpush1.msra.mxu0 %v30
    %733 = vmatprep.subr.mxu0 0.0
    %734 = vmatpush1.msra.mxu0 0.0
    %735 = vmatprep.subr.mxu0 0.0
    %736 = vmatpush1.msra.mxu0 0.0
    %737 = vmatprep.subr.mxu0 0.0
    %738 = vmatpush1.msra.mxu0 0.0
    %739 = vmatprep.subr.mxu0 0.0
    %740 = vmatpush1.msra.mxu0 0.0
    %741 = vmatprep.subr.mxu0 0.0
    %742 = vmatpush1.msra.mxu0 0.0
    %743 = vmatprep.subr.mxu0 0.0
    %744 = vmatpush1.msra.mxu0 0.0
    %745 = vmatprep.subr.mxu0 0.0
    %746 = vmatpush1.msra.mxu0 0.0
    %747 = vmatprep.subr.mxu0 0.0
    %748 = vmatpush1.msra.mxu0 0.0
    %749 = vmatprep.subr.mxu0 0.0
    %750 = vmatpush1.msra.mxu0 0.0
    %751 = vmatprep.subr.mxu0 0.0
    %752 = vmatpush1.msra.mxu0 0.0
    %753 = vmatprep.subr.mxu0 0.0
    %754 = vmatpush1.msra.mxu0 0.0
    %755 = vmatprep.subr.mxu0 0.0
    %756 = vmatpush1.msra.mxu0 0.0
    %757 = vmatprep.subr.mxu0 0.0
    %758 = vmatpush1.msra.mxu0 0.0
    %759 = vmatprep.subr.mxu0 0.0
    %760 = vmatpush1.msra.mxu0 0.0
    %761 = vmatprep.subr.mxu0 0.0
    %762 = vmatpush1.msra.mxu0 0.0
    %763 = vmatprep.subr.mxu0 0.0
    %764 = vmatpush1.msra.mxu0 0.0
    %765 = vmatprep.subr.mxu0 0.0
    %766 = vmatpush1.msra.mxu0 0.0
    %767 = vmatprep.subr.mxu0 0.0
    %768 = vmatpush1.msra.mxu0 0.0
    %769 = vmatprep.subr.mxu0 0.0
    %770 = vmatpush1.msra.mxu0 0.0
    %771 = vmatprep.subr.mxu0 0.0
    %772 = vmatpush1.msra.mxu0 0.0
    %773 = vmatprep.subr.mxu0 0.0
    %774 = vmatpush1.msra.mxu0 0.0
    %775 = vmatprep.subr.mxu0 0.0
    %776 = vmatpush1.msra.mxu0 0.0
    %777 = vmatprep.subr.mxu0 0.0
    %778 = vmatpush1.msra.mxu0 0.0
    %779 = vmatprep.subr.mxu0 0.0
    %780 = vmatpush1.msra.mxu0 0.0
    %781 = vmatprep.subr.mxu0 0.0
    %782 = vmatpush1.msra.mxu0 0.0
    %783 = vmatprep.subr.mxu0 0.0
    %784 = vmatpush1.msra.mxu0 0.0
    %785 = vmatprep.subr.mxu0 0.0
    %786 = vmatpush1.msra.mxu0 0.0
    %787 = vmatprep.subr.mxu0 0.0
    %788 = vmatpush1.msra.mxu0 0.0
    %789 = vmatprep.mubr.f32.mxu0 0.0
    %790 = vmatmul.mubr.f32.gmra.mrb[0].mxu0 %v723
    %v791 = vpop.f32.mrb[0].mxu0
    %v792 = vadd.f32 %v39, %v791
    %v793 = vpop.f32.mrb[0].mxu0
    %794 = vdwg.mxu0
    %v795 = vadd.f32 %v719, %v792
    %v796 = vxor.u32 %v795, 2147483648
    %v797 = vmul.f32 %v796, 1.442695
    %v798 = vpow.pop %v797
    %v799 = vadd.f32 %v798, 1.0
    %v800 = vrcp.pop %v799
    %v801 = vmul.f32 1.0, %v800
    %803 = vrot.lane.b32.xlu0 %v792, 64
    %v804 = vpop.permute.xlu0 %803
    %v806 = vmul.f32 %v801, %v804
    %808 = vrot.lane.b32.xlu0 %v806, 64
    %v809 = vpop.permute.xlu0 %808
    %v811 = vadd.f32 %v719, %v809
    %v812 = vtanh.pop %v811
    %v813 = vsub.f32 1.0, %v801
    %815 = vrot.lane.b32.xlu0 %v812, 96
    %v816 = vpop.permute.xlu0 %815
    %v818 = vmul.f32 %v813, %v816
    %v819 = vmul.f32 %v801, %v716
    %v820 = vadd.f32 %v818, %v819
    %s821 = sadd.s32 %s32, 6
    %v822 = vstv %s821
    %vm823 = vcmp.lt.s32.totalorder %v822, %v26
    %v824 = vsel %vm823, 1, 0
    %825 = vset.pattern.permute.xlu0 0
    %826 = vperm.xlu0 %825, %v824
    %v827 = vpop.permute.xlu0 %826
    %vm828 = vcmp.eq.s32.totalorder %v827, 1
    %v829 = vsel %vm828, %v820, %v716
    %v830 = vsel %vm828, %v820, 0.0
    %s831 = scalar_lea.vmem %s1, 14
    %v832 = vld [vmem:[%s831] sm:$0x3]
    %834 = vrot.lane.b32.xlu0 %v829, 96
    %v835 = vpop.permute.xlu0 %834
    %v836 = vsel %vm41, %v835, 0
    %838 = vmatprep.subr.mxu0 0.0
    %839 = vmatpush1.msra.mxu0 %v27
    %840 = vmatprep.subr.mxu0 0.0
    %841 = vmatpush1.msra.mxu0 %v28
    %842 = vmatprep.subr.mxu0 0.0
    %843 = vmatpush1.msra.mxu0 %v29
    %844 = vmatprep.subr.mxu0 0.0
    %845 = vmatpush1.msra.mxu0 %v30
    %846 = vmatprep.subr.mxu0 0.0
    %847 = vmatpush1.msra.mxu0 0.0
    %848 = vmatprep.subr.mxu0 0.0
    %849 = vmatpush1.msra.mxu0 0.0
    %850 = vmatprep.subr.mxu0 0.0
    %851 = vmatpush1.msra.mxu0 0.0
    %852 = vmatprep.subr.mxu0 0.0
    %853 = vmatpush1.msra.mxu0 0.0
    %854 = vmatprep.subr.mxu0 0.0
    %855 = vmatpush1.msra.mxu0 0.0
    %856 = vmatprep.subr.mxu0 0.0
    %857 = vmatpush1.msra.mxu0 0.0
    %858 = vmatprep.subr.mxu0 0.0
    %859 = vmatpush1.msra.mxu0 0.0
    %860 = vmatprep.subr.mxu0 0.0
    %861 = vmatpush1.msra.mxu0 0.0
    %862 = vmatprep.subr.mxu0 0.0
    %863 = vmatpush1.msra.mxu0 0.0
    %864 = vmatprep.subr.mxu0 0.0
    %865 = vmatpush1.msra.mxu0 0.0
    %866 = vmatprep.subr.mxu0 0.0
    %867 = vmatpush1.msra.mxu0 0.0
    %868 = vmatprep.subr.mxu0 0.0
    %869 = vmatpush1.msra.mxu0 0.0
    %870 = vmatprep.subr.mxu0 0.0
    %871 = vmatpush1.msra.mxu0 0.0
    %872 = vmatprep.subr.mxu0 0.0
    %873 = vmatpush1.msra.mxu0 0.0
    %874 = vmatprep.subr.mxu0 0.0
    %875 = vmatpush1.msra.mxu0 0.0
    %876 = vmatprep.subr.mxu0 0.0
    %877 = vmatpush1.msra.mxu0 0.0
    %878 = vmatprep.subr.mxu0 0.0
    %879 = vmatpush1.msra.mxu0 0.0
    %880 = vmatprep.subr.mxu0 0.0
    %881 = vmatpush1.msra.mxu0 0.0
    %882 = vmatprep.subr.mxu0 0.0
    %883 = vmatpush1.msra.mxu0 0.0
    %884 = vmatprep.subr.mxu0 0.0
    %885 = vmatpush1.msra.mxu0 0.0
    %886 = vmatprep.subr.mxu0 0.0
    %887 = vmatpush1.msra.mxu0 0.0
    %888 = vmatprep.subr.mxu0 0.0
    %889 = vmatpush1.msra.mxu0 0.0
    %890 = vmatprep.subr.mxu0 0.0
    %891 = vmatpush1.msra.mxu0 0.0
    %892 = vmatprep.subr.mxu0 0.0
    %893 = vmatpush1.msra.mxu0 0.0
    %894 = vmatprep.subr.mxu0 0.0
    %895 = vmatpush1.msra.mxu0 0.0
    %896 = vmatprep.subr.mxu0 0.0
    %897 = vmatpush1.msra.mxu0 0.0
    %898 = vmatprep.subr.mxu0 0.0
    %899 = vmatpush1.msra.mxu0 0.0
    %900 = vmatprep.subr.mxu0 0.0
    %901 = vmatpush1.msra.mxu0 0.0
    %902 = vmatprep.mubr.f32.mxu0 0.0
    %903 = vmatmul.mubr.f32.gmra.mrb[0].mxu0 %v836
    %v904 = vpop.f32.mrb[0].mxu0
    %v905 = vadd.f32 %v39, %v904
    %v906 = vpop.f32.mrb[0].mxu0
    %907 = vdwg.mxu0
    %v908 = vadd.f32 %v832, %v905
    %v909 = vxor.u32 %v908, 2147483648
    %v910 = vmul.f32 %v909, 1.442695
    %v911 = vpow.pop %v910
    %v912 = vadd.f32 %v911, 1.0
    %v913 = vrcp.pop %v912
    %v914 = vmul.f32 1.0, %v913
    %916 = vrot.lane.b32.xlu0 %v905, 64
    %v917 = vpop.permute.xlu0 %916
    %v919 = vmul.f32 %v914, %v917
    %921 = vrot.lane.b32.xlu0 %v919, 64
    %v922 = vpop.permute.xlu0 %921
    %v924 = vadd.f32 %v832, %v922
    %v925 = vtanh.pop %v924
    %v926 = vsub.f32 1.0, %v914
    %928 = vrot.lane.b32.xlu0 %v925, 96
    %v929 = vpop.permute.xlu0 %928
    %v931 = vmul.f32 %v926, %v929
    %v932 = vmul.f32 %v914, %v829
    %v933 = vadd.f32 %v931, %v932
    %s934 = sadd.s32 %s32, 7
    %v935 = vstv %s934
    %vm936 = vcmp.lt.s32.totalorder %v935, %v26
    %v937 = vsel %vm936, 1, 0
    %938 = vset.pattern.permute.xlu0 0
    %939 = vperm.xlu0 %938, %v937
    %v940 = vpop.permute.xlu0 %939
    %vm941 = vcmp.eq.s32.totalorder %v940, 1
    %v942 = vsel %vm941, %v933, %v829
    %v943 = vsel %vm941, %v933, 0.0
    %945 = vrot.lane.b32.xlu0 %v942, 96
    %v946 = vpop.permute.xlu0 %945
    %vm948 = vcmask 254976
    %949 = vst.msk [vmem:[#allocation2] sm:$0x3] %vm948, %v946
    %951 = vrot.lane.b32.xlu0 %v152, 96
    %v952 = vpop.permute.xlu0 %951
    %955 = vrot.lane.b32.xlu0 %v378, 32
    %v956 = vpop.permute.xlu0 %955
    %959 = vrot.lane.b32.xlu0 %v491, 64
    %v960 = vpop.permute.xlu0 %959
    %963 = vrot.lane.b32.xlu0 %v604, 96
    %v964 = vpop.permute.xlu0 %963
    %967 = vrot.lane.b32.xlu0 %v830, 32
    %v968 = vpop.permute.xlu0 %967
    %971 = vrot.lane.b32.xlu0 %v943, 64
    %v972 = vpop.permute.xlu0 %971
    %v974 = vsel %vm41, %v952, %v265
    %vm975 = vcmask 523264
    %v976 = vsel %vm975, %v974, %v956
    %vm977 = vcmask 785408
    %v978 = vsel %vm977, %v976, %v960
    %v979 = vsel %vm41, %v964, %v717
    %v980 = vsel %vm975, %v979, %v968
    %v981 = vsel %vm977, %v980, %v972
    %v984 = vcombine.low %v978, %v981
    %v986 = vunpack.c.l.s4 1983009808
    %v987 = vunpack.c.0.s8 %v986
    %v988 = vlaneseq
    %v989 = vshrl.u32 %v988, 7
    %v990 = vsub.s32 %v987, %v989
    %v991 = vrot.slane %v984, %v990
    %993 = vst [vmem:[%s4] sm:$0xf] %v991
    // Predicated region
    $region22: #{gru_forward.1} parent=1 // pred_check
      %p994 = pneg %p20
    $region23: #{gru_forward.1} parent=1 // pred_check_branch
      %996 = sbr.rel (%p994) target = $region25
    $region24: #{gru_forward.1} parent=1 // pred_region
      %997 = vst.msk [vmem:[#allocation3] sm:$0x3] %vm948, %v946
    $region25: #{gru_forward.1} parent=1 // pred_fallthru
      _
    // Predicated region
    $region26: #{gru_forward.1} parent=1 // pred_check
      _
    $region27: #{gru_forward.1} parent=1 // pred_check_branch
      %999 = sbr.rel (0) target = $region29
    $region28: #{gru_forward.1} parent=1 // pred_region
      _
    $region29: #{gru_forward.1} parent=1 // pred_fallthru
      _
    // Predicated region
    $region30: #{gru_forward.1} parent=1 // pred_check
      _
    $region31: #{gru_forward.1} parent=1 // pred_check_branch
      %1001 = sbr.rel (0) target = $region33
    $region32: #{gru_forward.1} parent=1 // pred_region
      %s1003 = ssub.s32 32, 32
      %1004 = vsyncadd [#allocation4], %s1003
      %s1006 = sshll.u32 [#allocation3], 4
      %s1007 = int_to_ptr.vmem [resolvable:$true] %s1006
      %1009 = dma.vmem_to_hbm [thread:$0]  %s1007, 32, %s5, [#allocation4]
    $region33: #{gru_forward.1} parent=1 // pred_fallthru
      _
    // Predicated region
    $region34: #{gru_forward.1} parent=1 // pred_check
      _
    $region35: #{gru_forward.1} parent=1 // pred_check_branch
      %1011 = sbr.rel (0) target = $region37
    $region36: #{gru_forward.1} parent=1 // pred_region
      _
    $region37: #{gru_forward.1} parent=1 // pred_fallthru
      _
    // Predicated region
    $region38: #{gru_forward.1} parent=1 // pred_check
      _
    $region39: #{gru_forward.1} parent=1 // pred_check_branch
      %1013 = sbr.rel (0) target = $region41
    $region40: #{gru_forward.1} parent=1 // pred_region
      %1014 = dma.done [#allocation4], 32
    $region41: #{gru_forward.1} parent=1 // pred_fallthru
      _
    %1015 = vsyncpa [#allocation4], 1

</llo_original>
